<compile_context>
chip_gen: v5e
topology: v5e:2x2
jax: 0.10.0
libtpu: 0.0.40
codegen_flags: <defaults>
</compile_context>

<pallas_src>
import math
from functools import partial

import jax
import jax.numpy as jnp
from jax.experimental import pallas as pl
from jax.experimental.pallas import tpu as pltpu


# ----------------------------- config / tiling ------------------------------

def _device_kind():
    try:
        return jax.devices()[0].device_kind.lower()
    except Exception:
        return ""


_IS_V7 = "v7" in _device_kind()
# v7x: 64 MiB physical VMEM -> 512-row tiles, 48 MiB scoped limit.
# v5e/v6e: 128 MiB VMEM -> 1024-row tiles, 96 MiB scoped limit.
_TM_TARGET = 512 if _IS_V7 else 1024
_TQ_TARGET = 512 if _IS_V7 else 1024
_VMEM_LIMIT_BYTES = (48 if _IS_V7 else 96) * 1024 * 1024
_W_RESIDENT_BYTES = 8 * 1024 * 1024   # weights at/below this stay VMEM-resident

_LN_EPS = 1e-5
_GELU_C = 0.7978845608028654  # sqrt(2/pi), matches nn.GELU(approximate='tanh')


def _tile(dim, target, align):
    """Largest tile <= target that is a multiple of `align` and divides dim,
    else the full dim (always a legal block extent)."""
    if dim <= target:
        return dim
    t = (target // align) * align
    while t >= align:
        if dim % t == 0:
            return t
        t -= align
    return dim


def _round_up(x, m):
    return (x + m - 1) // m * m


def _cparams(*semantics):
    return pltpu.CompilerParams(dimension_semantics=semantics,
                                vmem_limit_bytes=_VMEM_LIMIT_BYTES)


def _layernorm_f32(x, g, b):
    mu = jnp.mean(x, axis=-1, keepdims=True)
    var = jnp.mean(jnp.square(x - mu), axis=-1, keepdims=True)
    xn = (x - mu) * jax.lax.rsqrt(var + _LN_EPS)
    return xn * g + b


# ----------------------------- Pallas kernels ------------------------------

def _ln_linear_kernel(x_ref, g_ref, b_ref, w_ref, bias_ref, o_ref, xn_ref):
    # x: (tm, C) f32 | g,b: (1, C) f32 | w: (C, tn) bf16 | bias: (1, tn) f32
    # LayerNorm prologue computed once per row-tile (j == 0), cached in scratch.
    @pl.when(pl.program_id(1) == 0)
    def _():
        xn_ref[...] = _layernorm_f32(
            x_ref[...], g_ref[...], b_ref[...]).astype(jnp.bfloat16)

    acc = jnp.dot(xn_ref[...], w_ref[...], preferred_element_type=jnp.float32)
    o_ref[...] = (acc + bias_ref[...]).astype(o_ref.dtype)


def _linear_residual_kernel(y_ref, w_ref, bias_ref, res_ref, o_ref):
    # y: (tm, C) bf16 | w: (C, tn) bf16 | bias: (1, tn) f32 | res: (tm, tn) f32
    # Fused residual add (saves a full (N,C) f32 read+write vs a separate XLA add).
    acc = jnp.dot(y_ref[...], w_ref[...], preferred_element_type=jnp.float32)
    o_ref[...] = (res_ref[...] + acc + bias_ref[...]).astype(o_ref.dtype)


def _ln_mlp_kernel(x_ref, g_ref, b_ref, w1_ref, b1_ref, w2_ref, b2_ref,
                   o_ref, xn_ref):
    # Fused LN -> fc -> GELU(tanh) -> proj -> +residual, tiled over the 4C
    # hidden dim (grid axis 1, "arbitrary"). Accumulates directly into the
    # VMEM-resident f32 output block (no separate acc scratch).
    k = pl.program_id(1)

    @pl.when(k == 0)
    def _():
        xn_ref[...] = _layernorm_f32(
            x_ref[...], g_ref[...], b_ref[...]).astype(jnp.bfloat16)
        # seed with residual + c_proj bias; every k step adds its partial matmul
        o_ref[...] = x_ref[...] + b2_ref[...]

    h = (jnp.dot(xn_ref[...], w1_ref[...], preferred_element_type=jnp.float32)
         + b1_ref[...])
    g = 0.5 * h * (1.0 + jnp.tanh(_GELU_C * (h + 0.044715 * h * h * h)))
    o_ref[...] += jnp.dot(g.astype(jnp.bfloat16), w2_ref[...],
                          preferred_element_type=jnp.float32)


def _flash_attn_kernel(q_ref, k_ref, v_ref, o_ref, qs_ref, m_ref, l_ref,
                       acc_ref, *, scale):
    # q/k/v blocks: (hb, tq|tk, hd) bf16.  Online softmax over kv tiles.
    # Requires tq == tk (enforced by wrapper) for the diagonal-tile logic.
    qi = pl.program_id(1)
    kv = pl.program_id(2)
    nk = pl.num_programs(2)

    @pl.when(kv == 0)
    def _():
        # Fold 1/sqrt(hd) into q once per (head-block, q-tile), not per kv step.
        qs_ref[...] = (q_ref[...].astype(jnp.float32) * scale
                       ).astype(jnp.bfloat16)
        m_ref[...] = jnp.full_like(m_ref, -1e30)
        l_ref[...] = jnp.zeros_like(l_ref)
        acc_ref[...] = jnp.zeros_like(acc_ref)

    def step(masked):
        q = qs_ref[...]                                     # (hb, tq, hd)
        s = jax.lax.dot_general(
            q, k_ref[...], (((2,), (2,)), ((0,), (0,))),
            preferred_element_type=jnp.float32)             # (hb, tq, tk)
        if masked:
            _, tq, _ = q_ref.shape
            tk = k_ref.shape[1]
            row = jax.lax.broadcasted_iota(jnp.int32, (tq, tk), 0)
            col = jax.lax.broadcasted_iota(jnp.int32, (tq, tk), 1)
            mask = (col <= row)[None, :, :]                 # diag tile: tq == tk
            s = jnp.where(mask, s, -1e30)
        m_prev = m_ref[...]
        m_new = jnp.maximum(m_prev, jnp.max(s, axis=-1, keepdims=True))
        alpha = jnp.exp(m_prev - m_new)
        p = jnp.exp(s - m_new)
        if masked:
            p = jnp.where(mask, p, 0.0)    # safe even if a row were all-masked
        l_ref[...] = alpha * l_ref[...] + jnp.sum(p, axis=-1, keepdims=True)
        pv = jax.lax.dot_general(
            p.astype(jnp.bfloat16), v_ref[...], (((2,), (1,)), ((0,), (0,))),
            preferred_element_type=jnp.float32)             # (hb, tq, hd)
        acc_ref[...] = alpha * acc_ref[...] + pv
        m_ref[...] = m_new

    @pl.when(kv < qi)          # strictly below the diagonal: no mask needed
    def _():
        step(masked=False)

    @pl.when(kv == qi)         # diagonal tile: apply causal mask
    def _():
        step(masked=True)

    @pl.when(kv == nk - 1)
    def _():
        inv = pl.reciprocal(l_ref[...], approx=True)
        o_ref[...] = (acc_ref[...] * inv).astype(o_ref.dtype)


def _ln_matmul_kernel(x_ref, g_ref, b_ref, w_ref, o_ref, xn_ref):
    # Final LN + lm_head matmul (no bias).  w: (C, tv) bf16 (pre-transposed,
    # vocab-padded tied embedding stored once at init).
    @pl.when(pl.program_id(1) == 0)
    def _():
        xn_ref[...] = _layernorm_f32(
            x_ref[...], g_ref[...], b_ref[...]).astype(jnp.bfloat16)

    o_ref[...] = jnp.dot(xn_ref[...], w_ref[...],
                         preferred_element_type=jnp.float32)


# ----------------------------- pallas_call wrappers ------------------------

def ln_linear(x2d, g, b, w, bias, out_dtype):
    N, C = x2d.shape
    O = w.shape[1]
    tm = _tile(N, _TM_TARGET, 8)
    # Keep the whole weight VMEM-resident (constant block index across rows)
    # when it fits the budget; otherwise tile the output columns.
    tn = O if C * O * 2 <= _W_RESIDENT_BYTES else _tile(O, 1024, 128)
    return pl.pallas_call(
        _ln_linear_kernel,
        out_shape=jax.ShapeDtypeStruct((N, O), out_dtype),
        grid=(N // tm, O // tn),
        in_specs=[
            pl.BlockSpec((tm, C), lambda i, j: (i, 0)),
            pl.BlockSpec((1, C), lambda i, j: (0, 0)),
            pl.BlockSpec((1, C), lambda i, j: (0, 0)),
            pl.BlockSpec((C, tn), lambda i, j: (0, j)),
            pl.BlockSpec((1, tn), lambda i, j: (0, j)),
        ],
        out_specs=pl.BlockSpec((tm, tn), lambda i, j: (i, j)),
        scratch_shapes=[pltpu.VMEM((tm, C), jnp.bfloat16)],
        compiler_params=_cparams("parallel", "arbitrary"),
    )(x2d, g.reshape(1, C), b.reshape(1, C), w, bias.reshape(1, O))


def linear_residual(y2d, w, bias, res2d):
    # out = res + y @ w + bias   (residual add fused into the matmul epilogue)
    N, C = y2d.shape
    O = w.shape[1]
    tm = _tile(N, _TM_TARGET, 8)
    tn = O if C * O * 2 <= _W_RESIDENT_BYTES else _tile(O, 1024, 128)
    return pl.pallas_call(
        _linear_residual_kernel,
        out_shape=jax.ShapeDtypeStruct((N, O), jnp.float32),
        grid=(N // tm, O // tn),
        in_specs=[
            pl.BlockSpec((tm, C), lambda i, j: (i, 0)),
            pl.BlockSpec((C, tn), lambda i, j: (0, j)),
            pl.BlockSpec((1, tn), lambda i, j: (0, j)),
            pl.BlockSpec((tm, tn), lambda i, j: (i, j)),
        ],
        out_specs=pl.BlockSpec((tm, tn), lambda i, j: (i, j)),
        compiler_params=_cparams("parallel", "parallel"),
    )(y2d, w, bias.reshape(1, O), res2d)


def ln_mlp(x2d, g, b, w1, b1, w2, b2):
    N, C = x2d.shape
    H = w1.shape[1]
    tm = _tile(N, _TM_TARGET, 8)
    if 4 * C * H <= _W_RESIDENT_BYTES:        # both bf16 slabs resident
        th = H
    else:
        th_target = max(128, (_W_RESIDENT_BYTES // (4 * C)) // 128 * 128)
        th = _tile(H, th_target, 128)
    return pl.pallas_call(
        _ln_mlp_kernel,
        out_shape=jax.ShapeDtypeStruct((N, C), jnp.float32),
        grid=(N // tm, H // th),
        in_specs=[
            pl.BlockSpec((tm, C), lambda i, k: (i, 0)),
            pl.BlockSpec((1, C), lambda i, k: (0, 0)),
            pl.BlockSpec((1, C), lambda i, k: (0, 0)),
            pl.BlockSpec((C, th), lambda i, k: (0, k)),
            pl.BlockSpec((1, th), lambda i, k: (0, k)),
            pl.BlockSpec((th, C), lambda i, k: (k, 0)),
            pl.BlockSpec((1, C), lambda i, k: (0, 0)),
        ],
        out_specs=pl.BlockSpec((tm, C), lambda i, k: (i, 0)),
        scratch_shapes=[pltpu.VMEM((tm, C), jnp.bfloat16)],
        compiler_params=_cparams("parallel", "arbitrary"),
    )(x2d, g.reshape(1, C), b.reshape(1, C), w1, b1.reshape(1, H),
      w2, b2.reshape(1, C))


def causal_attention(q, k, v):
    # q, k, v: (B*H, T, hd) bf16 -> (B*H, T, hd) bf16
    BH, T, hd = q.shape
    tq = _tile(T, _TQ_TARGET, 8)
    tk = tq                                   # must match for diag-tile logic
    hb = 2 if BH % 2 == 0 else 1              # 2 heads / step amortizes overhead
    scale = 1.0 / math.sqrt(hd)
    kern = partial(_flash_attn_kernel, scale=scale)
    # K/V index maps clamp the kv block to qi: fully-masked (skipped) tiles map
    # to the already-resident block, so Pallas elides their DMA entirely.
    return pl.pallas_call(
        kern,
        out_shape=jax.ShapeDtypeStruct((BH, T, hd), jnp.bfloat16),
        grid=(BH // hb, T // tq, T // tk),
        in_specs=[
            pl.BlockSpec((hb, tq, hd), lambda b, qi, kv: (b, qi, 0)),
            pl.BlockSpec((hb, tk, hd),
                         lambda b, qi, kv: (b, jnp.minimum(kv, qi), 0)),
            pl.BlockSpec((hb, tk, hd),
                         lambda b, qi, kv: (b, jnp.minimum(kv, qi), 0)),
        ],
        out_specs=pl.BlockSpec((hb, tq, hd), lambda b, qi, kv: (b, qi, 0)),
        scratch_shapes=[pltpu.VMEM((hb, tq, hd), jnp.bfloat16),   # scaled q
                        pltpu.VMEM((hb, tq, 1), jnp.float32),     # m
                        pltpu.VMEM((hb, tq, 1), jnp.float32),     # l
                        pltpu.VMEM((hb, tq, hd), jnp.float32)],   # acc
        compiler_params=_cparams("parallel", "parallel", "arbitrary"),
    )(q, k, v)


def ln_lm_head(x2d, g, b, wte_t_bf16):
    # x2d: (N, C) f32, wte_t_bf16: (C, V_pad) bf16 -> logits (N, V_pad) f32
    N, C = x2d.shape
    Vp = wte_t_bf16.shape[1]
    tm = _tile(N, _TM_TARGET, 8)
    tv = _tile(Vp, 2048, 128)   # Vp is a multiple of 1024 -> tv >= 1024 always
    return pl.pallas_call(
        _ln_matmul_kernel,
        out_shape=jax.ShapeDtypeStruct((N, Vp), jnp.float32),
        grid=(N // tm, Vp // tv),
        in_specs=[
            pl.BlockSpec((tm, C), lambda i, j: (i, 0)),
            pl.BlockSpec((1, C), lambda i, j: (0, 0)),
            pl.BlockSpec((1, C), lambda i, j: (0, 0)),
            pl.BlockSpec((C, tv), lambda i, j: (0, j)),
        ],
        out_specs=pl.BlockSpec((tm, tv), lambda i, j: (i, j)),
        scratch_shapes=[pltpu.VMEM((tm, C), jnp.bfloat16)],
        compiler_params=_cparams("parallel", "arbitrary"),
    )(x2d, g.reshape(1, C), b.reshape(1, C), wte_t_bf16)


# ----------------------------- Parameter init ------------------------------

def init_params(key, *, vocab_size, block_size, n_layer, n_head, n_embed):
    C = n_embed
    std = 0.02
    proj_std = 0.02 * (2 * n_layer) ** -0.5  # NANOGPT_SCALE_INIT on attn.c_proj
    keys = jax.random.split(key, 2 + 4 * n_layer)
    wte = std * jax.random.normal(keys[0], (vocab_size, C), jnp.float32)
    v_pad = _round_up(vocab_size, 1024)       # lane-dense lm_head tiles, no
    wte_t = jnp.pad(wte.T.astype(jnp.bfloat16),          # full-dim fallback
                    ((0, 0), (0, v_pad - vocab_size)))
    params = {
        "wte": wte,                           # f32, used for embedding gather
        "wte_t_bf16": wte_t,                  # tied lm_head weight, padded
        "wpe": std * jax.random.normal(keys[1], (block_size, C), jnp.float32),
        "lnf_g": jnp.ones((C,), jnp.float32),
        "lnf_b": jnp.zeros((C,), jnp.float32),
        "blocks": [],
    }
    for l in range(n_layer):
        k0, k1, k2, k3 = keys[2 + 4 * l: 2 + 4 * (l + 1)]
        blk = {
            "ln1_g": jnp.ones((C,), jnp.float32),
            "ln1_b": jnp.zeros((C,), jnp.float32),
            "attn_w": (std * jax.random.normal(k0, (C, 3 * C), jnp.float32)
                       ).astype(jnp.bfloat16),
            "attn_b": jnp.zeros((3 * C,), jnp.float32),
            "proj_w": (proj_std * jax.random.normal(k1, (C, C), jnp.float32)
                       ).astype(jnp.bfloat16),
            "proj_b": jnp.zeros((C,), jnp.float32),
            "ln2_g": jnp.ones((C,), jnp.float32),
            "ln2_b": jnp.zeros((C,), jnp.float32),
            "fc_w": (std * jax.random.normal(k2, (C, 4 * C), jnp.float32)
                     ).astype(jnp.bfloat16),
            "fc_b": jnp.zeros((4 * C,), jnp.float32),
            "mproj_w": (std * jax.random.normal(k3, (4 * C, C), jnp.float32)
                        ).astype(jnp.bfloat16),
            "mproj_b": jnp.zeros((C,), jnp.float32),
        }
        params["blocks"].append(blk)
    return params


# ----------------------------- GPT forward ---------------------------------

def gpt_forward(params, idx, *, n_head):
    B, T = idx.shape
    C = params["wpe"].shape[1]
    V = params["wte"].shape[0]
    hd = C // n_head
    N = B * T

    tok_emb = params["wte"][idx]              # (B, T, C) gather   (glue)
    pos_emb = params["wpe"][:T]               # (T, C)
    x = (tok_emb + pos_emb).reshape(N, C)     # residual stream, f32

    for blk in params["blocks"]:
        # ---- attention sub-block: fused LN + QKV projection ----
        qkv = ln_linear(x, blk["ln1_g"], blk["ln1_b"],
                        blk["attn_w"], blk["attn_b"],
                        out_dtype=jnp.bfloat16)                 # (N, 3C)
        q, k, v = jnp.split(qkv, 3, axis=-1)

        # TODO(synk): head split/merge transposes stay as XLA glue; fusing them
        # into the attention BlockSpecs needs sub-128-lane (hd-wide) blocks or
        # in-kernel 2-head lane packing.
        def to_heads(t):
            return (t.reshape(B, T, n_head, hd)
                     .transpose(0, 2, 1, 3)
                     .reshape(B * n_head, T, hd))

        y = causal_attention(to_heads(q), to_heads(k), to_heads(v))
        y = (y.reshape(B, n_head, T, hd)
              .transpose(0, 2, 1, 3)
              .reshape(N, C))
        # fused c_proj + residual add
        x = linear_residual(y, blk["proj_w"], blk["proj_b"], x)

        # ---- MLP sub-block: fused LN + fc + GELU + proj + residual add ----
        x = ln_mlp(x, blk["ln2_g"], blk["ln2_b"],
                   blk["fc_w"], blk["fc_b"], blk["mproj_w"], blk["mproj_b"])

    # ---- fused final LN + tied lm_head (vocab-padded, then sliced back) ----
    logits = ln_lm_head(x, params["lnf_g"], params["lnf_b"],
                        params["wte_t_bf16"])
    logits = logits[:, :V].reshape(B, T, V)
    # TODO(synk): targets / cross-entropy loss path not exercised (targets=None).
    return logits


# ----------------------------- pure-JAX reference ---------------------------

def _ref_forward(params, idx, n_head):
    # f32 reference using the same (bf16-stored) weights, for a sanity check.
    B, T = idx.shape
    C = params["wpe"].shape[1]
    V = params["wte"].shape[0]
    hd = C // n_head

    def ln(x, g, b):
        mu = x.mean(-1, keepdims=True)
        var = ((x - mu) ** 2).mean(-1, keepdims=True)
        return (x - mu) / jnp.sqrt(var + _LN_EPS) * g + b

    def gelu(x):
        return 0.5 * x * (1.0 + jnp.tanh(_GELU_C * (x + 0.044715 * x ** 3)))

    x = params["wte"][idx] + params["wpe"][:T]
    for blk in params["blocks"]:
        xn = ln(x, blk["ln1_g"], blk["ln1_b"])
        qkv = xn @ blk["attn_w"].astype(jnp.float32) + blk["attn_b"]
        q, k, v = jnp.split(qkv, 3, axis=-1)

        def heads(t):
            return t.reshape(B, T, n_head, hd).transpose(0, 2, 1, 3)

        q, k, v = heads(q), heads(k), heads(v)
        s = (q @ k.transpose(0, 1, 3, 2)) / math.sqrt(hd)
        mask = jnp.tril(jnp.ones((T, T), bool))
        s = jnp.where(mask, s, -jnp.inf)
        p = jax.nn.softmax(s, axis=-1)
        y = (p @ v).transpose(0, 2, 1, 3).reshape(B, T, C)
        x = x + y @ blk["proj_w"].astype(jnp.float32) + blk["proj_b"]
        xn = ln(x, blk["ln2_g"], blk["ln2_b"])
        h = gelu(xn @ blk["fc_w"].astype(jnp.float32) + blk["fc_b"])
        x = x + h @ blk["mproj_w"].astype(jnp.float32) + blk["mproj_b"]
    xn = ln(x, params["lnf_g"], params["lnf_b"])
    wt = params["wte_t_bf16"][:, :V].astype(jnp.float32)
    return xn @ wt


# ----------------------------- Demo ----------------------------------------

if __name__ == "__main__":
    # Small GPTConfig-consistent shapes.
    VOCAB = 128
    BLOCK_SIZE = 16
    N_LAYER = 2
    N_HEAD = 4
    N_EMBED = 32
    B, T = 2, 8

    key = jax.random.PRNGKey(0)
    pkey, ikey = jax.random.split(key)
    params = init_params(pkey, vocab_size=VOCAB, block_size=BLOCK_SIZE,
                         n_layer=N_LAYER, n_head=N_HEAD, n_embed=N_EMBED)
    idx = jax.random.randint(ikey, (B, T), 0, VOCAB, dtype=jnp.int32)

    fwd = jax.jit(partial(gpt_forward, n_head=N_HEAD))
    logits = fwd(params, idx)
    jax.block_until_ready(logits)

    assert logits.shape == (B, T, VOCAB), logits.shape
    assert bool(jnp.all(jnp.isfinite(logits)))

    ref = _ref_forward(params, idx, N_HEAD)
    rel = float(jnp.linalg.norm(logits - ref) / (jnp.linalg.norm(ref) + 1e-12))
    assert rel < 0.08, f"relative error too large: {rel}"

    print("KERNEL_OK")
</pallas_src>

<mosaic_0001>
module attributes {stable_mosaic.version = 11 : i64} {
  func.func @_ln_linear_kernel(%arg0: i32, %arg1: i32, %arg2: memref<16x32xf32, #tpu.memory_space<vmem>>, %arg3: memref<1x32xf32, #tpu.memory_space<vmem>>, %arg4: memref<1x32xf32, #tpu.memory_space<vmem>>, %arg5: memref<32x96xbf16, #tpu.memory_space<vmem>>, %arg6: memref<1x96xf32, #tpu.memory_space<vmem>>, %arg7: memref<16x96xbf16, #tpu.memory_space<vmem>>, %arg8: memref<16x32xbf16, #tpu.memory_space<vmem>>) attributes {dimension_semantics = [#tpu.dimension_semantics<parallel>, #tpu.dimension_semantics<arbitrary>], iteration_bounds = array<i64: 1, 1>, scalar_prefetch = 0 : i64, scratch_operands = 1 : i64, tpu.core_type = #tpu.core_type<tc>, window_params = [{transform_indices = @transform_0, window_bounds = array<i64: 16, 32>}, {pipeline_mode = #tpu.pipeline_mode<synchronous>, transform_indices = @transform_1, window_bounds = array<i64: 1, 32>}, {pipeline_mode = #tpu.pipeline_mode<synchronous>, transform_indices = @transform_2, window_bounds = array<i64: 1, 32>}, {transform_indices = @transform_3, window_bounds = array<i64: 32, 96>}, {transform_indices = @transform_4, window_bounds = array<i64: 1, 96>}, {transform_indices = @transform_5, window_bounds = array<i64: 16, 96>}]} {
    %c0_i32 = arith.constant 0 : i32
    %0 = arith.cmpi eq, %arg1, %c0_i32 : i32
    %1 = arith.extui %0 : i1 to i32
    %c0_i32_0 = arith.constant 0 : i32
    %2 = arith.cmpi ne, %1, %c0_i32_0 : i32
    scf.if %2 {
      %c0_8 = arith.constant 0 : index
      %c0_9 = arith.constant 0 : index
      %11 = vector.load %arg2[%c0_8, %c0_9] : memref<16x32xf32, #tpu.memory_space<vmem>>, vector<16x32xf32>
      %c0_10 = arith.constant 0 : index
      %c0_11 = arith.constant 0 : index
      %12 = vector.load %arg3[%c0_10, %c0_11] : memref<1x32xf32, #tpu.memory_space<vmem>>, vector<1x32xf32>
      %c0_12 = arith.constant 0 : index
      %c0_13 = arith.constant 0 : index
      %13 = vector.load %arg4[%c0_12, %c0_13] : memref<1x32xf32, #tpu.memory_space<vmem>>, vector<1x32xf32>
      %cst_14 = arith.constant dense<0.000000e+00> : vector<16xf32>
      %14 = vector.multi_reduction <add>, %11, %cst_14 [1] : vector<16x32xf32> to vector<16xf32>
      %15 = vector.shape_cast %14 : vector<16xf32> to vector<16x1xf32>
      %cst_15 = arith.constant 3.200000e+01 : f32
      %16 = vector.broadcast %cst_15 : f32 to vector<16x1xf32>
      %17 = arith.divf %15, %16 : vector<16x1xf32>
      %18 = vector.broadcast %17 : vector<16x1xf32> to vector<16x32xf32>
      %19 = arith.subf %11, %18 : vector<16x32xf32>
      %20 = arith.mulf %19, %19 : vector<16x32xf32>
      %cst_16 = arith.constant dense<0.000000e+00> : vector<16xf32>
      %21 = vector.multi_reduction <add>, %20, %cst_16 [1] : vector<16x32xf32> to vector<16xf32>
      %22 = vector.shape_cast %21 : vector<16xf32> to vector<16x1xf32>
      %cst_17 = arith.constant 3.200000e+01 : f32
      %23 = vector.broadcast %cst_17 : f32 to vector<16x1xf32>
      %24 = arith.divf %22, %23 : vector<16x1xf32>
      %25 = vector.broadcast %17 : vector<16x1xf32> to vector<16x32xf32>
      %26 = arith.subf %11, %25 : vector<16x32xf32>
      %cst_18 = arith.constant 9.99999974E-6 : f32
      %27 = vector.broadcast %cst_18 : f32 to vector<16x1xf32>
      %28 = arith.addf %24, %27 : vector<16x1xf32>
      %29 = math.rsqrt %28 : vector<16x1xf32>
      %30 = vector.broadcast %29 : vector<16x1xf32> to vector<16x32xf32>
      %31 = arith.mulf %26, %30 : vector<16x32xf32>
      %32 = vector.broadcast %12 : vector<1x32xf32> to vector<16x32xf32>
      %33 = arith.mulf %31, %32 : vector<16x32xf32>
      %34 = vector.broadcast %13 : vector<1x32xf32> to vector<16x32xf32>
      %35 = arith.addf %33, %34 : vector<16x32xf32>
      %36 = arith.truncf %35 : vector<16x32xf32> to vector<16x32xbf16>
      %c0_19 = arith.constant 0 : index
      %c0_20 = arith.constant 0 : index
      %37 = vector.load %arg8[%c0_19, %c0_20] : memref<16x32xbf16, #tpu.memory_space<vmem>>, vector<16x32xbf16>
      tpu.vector_store %arg8[%c0_19, %c0_20], %36 {strides = array<i32>} : memref<16x32xbf16, #tpu.memory_space<vmem>>, vector<16x32xbf16>,
    } else {
    }
    %c0 = arith.constant 0 : index
    %c0_1 = arith.constant 0 : index
    %3 = vector.load %arg8[%c0, %c0_1] : memref<16x32xbf16, #tpu.memory_space<vmem>>, vector<16x32xbf16>
    %c0_2 = arith.constant 0 : index
    %c0_3 = arith.constant 0 : index
    %4 = vector.load %arg5[%c0_2, %c0_3] : memref<32x96xbf16, #tpu.memory_space<vmem>>, vector<32x96xbf16>
    %cst = arith.constant dense<0.000000e+00> : vector<16x96xf32>
    %5 = tpu.matmul %3, %4, %cst {dimension_numbers = #tpu.dot_dimension_numbers<[1], [0], [0], [1], [0, 0, 1, 1], [], []>} : vector<16x32xbf16>, vector<32x96xbf16>, vector<16x96xf32> -> vector<16x96xf32>
    %c0_4 = arith.constant 0 : index
    %c0_5 = arith.constant 0 : index
    %6 = vector.load %arg6[%c0_4, %c0_5] : memref<1x96xf32, #tpu.memory_space<vmem>>, vector<1x96xf32>
    %7 = vector.broadcast %6 : vector<1x96xf32> to vector<16x96xf32>
    %8 = arith.addf %5, %7 : vector<16x96xf32>
    %9 = arith.truncf %8 : vector<16x96xf32> to vector<16x96xbf16>
    %c0_6 = arith.constant 0 : index
    %c0_7 = arith.constant 0 : index
    %10 = vector.load %arg7[%c0_6, %c0_7] : memref<16x96xbf16, #tpu.memory_space<vmem>>, vector<16x96xbf16>
    tpu.vector_store %arg7[%c0_6, %c0_7], %9 {strides = array<i32>} : memref<16x96xbf16, #tpu.memory_space<vmem>>, vector<16x96xbf16>,
    return
  }
  func.func @transform_0(%arg0: i32, %arg1: i32) -> (i32, i32) {
    %c0_i32 = arith.constant 0 : i32
    %c0_i32_0 = arith.constant 0 : i32
    return %arg0, %c0_i32 : i32, i32
  }
  func.func @transform_1(%arg0: i32, %arg1: i32) -> (i32, i32) {
    %c0_i32 = arith.constant 0 : i32
    %c0_i32_0 = arith.constant 0 : i32
    %c0_i32_1 = arith.constant 0 : i32
    return %c0_i32, %c0_i32_0 : i32, i32
  }
  func.func @transform_2(%arg0: i32, %arg1: i32) -> (i32, i32) {
    %c0_i32 = arith.constant 0 : i32
    %c0_i32_0 = arith.constant 0 : i32
    %c0_i32_1 = arith.constant 0 : i32
    return %c0_i32, %c0_i32_0 : i32, i32
  }
  func.func @transform_3(%arg0: i32, %arg1: i32) -> (i32, i32) {
    %c0_i32 = arith.constant 0 : i32
    %c0_i32_0 = arith.constant 0 : i32
    return %c0_i32, %arg1 : i32, i32
  }
  func.func @transform_4(%arg0: i32, %arg1: i32) -> (i32, i32) {
    %c0_i32 = arith.constant 0 : i32
    %c0_i32_0 = arith.constant 0 : i32
    return %c0_i32, %arg1 : i32, i32
  }
  func.func @transform_5(%arg0: i32, %arg1: i32) -> (i32, i32) {
    %c0_i32 = arith.constant 0 : i32
    return %arg0, %arg1 : i32, i32
  }
}

module attributes {stable_mosaic.version = 11 : i64} {
  func.func @_flash_attn_kernel(%arg0: i32, %arg1: i32, %arg2: i32, %arg3: memref<2x8x8xbf16, #tpu.memory_space<vmem>>, %arg4: memref<2x8x8xbf16, #tpu.memory_space<vmem>>, %arg5: memref<2x8x8xbf16, #tpu.memory_space<vmem>>, %arg6: memref<2x8x8xbf16, #tpu.memory_space<vmem>>, %arg7: memref<2x8x8xbf16, #tpu.memory_space<vmem>>, %arg8: memref<2x8x1xf32, #tpu.memory_space<vmem>>, %arg9: memref<2x8x1xf32, #tpu.memory_space<vmem>>, %arg10: memref<2x8x8xf32, #tpu.memory_space<vmem>>) attributes {dimension_semantics = [#tpu.dimension_semantics<parallel>, #tpu.dimension_semantics<parallel>, #tpu.dimension_semantics<arbitrary>], iteration_bounds = array<i64: 4, 1, 1>, scalar_prefetch = 0 : i64, scratch_operands = 4 : i64, tpu.core_type = #tpu.core_type<tc>, window_params = [{transform_indices = @transform_0, window_bounds = array<i64: 2, 8, 8>}, {transform_indices = @transform_1, window_bounds = array<i64: 2, 8, 8>}, {transform_indices = @transform_2, window_bounds = array<i64: 2, 8, 8>}, {transform_indices = @transform_3, window_bounds = array<i64: 2, 8, 8>}]} {
    %c0_i32 = arith.constant 0 : i32
    %0 = arith.cmpi eq, %arg2, %c0_i32 : i32
    %1 = arith.extui %0 : i1 to i32
    %c0_i32_0 = arith.constant 0 : i32
    %2 = arith.cmpi ne, %1, %c0_i32_0 : i32
    scf.if %2 {
      %c0 = arith.constant 0 : index
      %c0_5 = arith.constant 0 : index
      %c0_6 = arith.constant 0 : index
      %12 = vector.load %arg3[%c0, %c0_5, %c0_6] : memref<2x8x8xbf16, #tpu.memory_space<vmem>>, vector<2x8x8xbf16>
      %13 = arith.extf %12 : vector<2x8x8xbf16> to vector<2x8x8xf32>
      %cst = arith.constant 0.353553385 : f32
      %14 = vector.broadcast %cst : f32 to vector<2x8x8xf32>
      %15 = arith.mulf %13, %14 : vector<2x8x8xf32>
      %16 = arith.truncf %15 : vector<2x8x8xf32> to vector<2x8x8xbf16>
      %c0_7 = arith.constant 0 : index
      %c0_8 = arith.constant 0 : index
      %c0_9 = arith.constant 0 : index
      %17 = vector.load %arg7[%c0_7, %c0_8, %c0_9] : memref<2x8x8xbf16, #tpu.memory_space<vmem>>, vector<2x8x8xbf16>
      tpu.vector_store %arg7[%c0_7, %c0_8, %c0_9], %16 {strides = array<i32>} : memref<2x8x8xbf16, #tpu.memory_space<vmem>>, vector<2x8x8xbf16>,
      %cst_10 = arith.constant -1.000000e+30 : f32
      %18 = vector.broadcast %cst_10 : f32 to vector<2x8x1xf32>
      %c0_11 = arith.constant 0 : index
      %c0_12 = arith.constant 0 : index
      %c0_13 = arith.constant 0 : index
      %19 = vector.load %arg8[%c0_11, %c0_12, %c0_13] : memref<2x8x1xf32, #tpu.memory_space<vmem>>, vector<2x8x1xf32>
      tpu.vector_store %arg8[%c0_11, %c0_12, %c0_13], %18 {strides = array<i32>} : memref<2x8x1xf32, #tpu.memory_space<vmem>>, vector<2x8x1xf32>,
      %cst_14 = arith.constant 0.000000e+00 : f32
      %20 = vector.broadcast %cst_14 : f32 to vector<2x8x1xf32>
      %c0_15 = arith.constant 0 : index
      %c0_16 = arith.constant 0 : index
      %c0_17 = arith.constant 0 : index
      %21 = vector.load %arg9[%c0_15, %c0_16, %c0_17] : memref<2x8x1xf32, #tpu.memory_space<vmem>>, vector<2x8x1xf32>
      tpu.vector_store %arg9[%c0_15, %c0_16, %c0_17], %20 {strides = array<i32>} : memref<2x8x1xf32, #tpu.memory_space<vmem>>, vector<2x8x1xf32>,
      %cst_18 = arith.constant 0.000000e+00 : f32
      %22 = vector.broadcast %cst_18 : f32 to vector<2x8x8xf32>
      %c0_19 = arith.constant 0 : index
      %c0_20 = arith.constant 0 : index
      %c0_21 = arith.constant 0 : index
      %23 = vector.load %arg10[%c0_19, %c0_20, %c0_21] : memref<2x8x8xf32, #tpu.memory_space<vmem>>, vector<2x8x8xf32>
      tpu.vector_store %arg10[%c0_19, %c0_20, %c0_21], %22 {strides = array<i32>} : memref<2x8x8xf32, #tpu.memory_space<vmem>>, vector<2x8x8xf32>,
    } else {
    }
    %3 = arith.cmpi slt, %arg2, %arg1 : i32
    %4 = arith.extui %3 : i1 to i32
    %c0_i32_1 = arith.constant 0 : i32
    %5 = arith.cmpi ne, %4, %c0_i32_1 : i32
    scf.if %5 {
      %c0 = arith.constant 0 : index
      %c0_5 = arith.constant 0 : index
      %c0_6 = arith.constant 0 : index
      %12 = vector.load %arg7[%c0, %c0_5, %c0_6] : memref<2x8x8xbf16, #tpu.memory_space<vmem>>, vector<2x8x8xbf16>
      %c0_7 = arith.constant 0 : index
      %c0_8 = arith.constant 0 : index
      %c0_9 = arith.constant 0 : index
      %13 = vector.load %arg4[%c0_7, %c0_8, %c0_9] : memref<2x8x8xbf16, #tpu.memory_space<vmem>>, vector<2x8x8xbf16>
      %cst = arith.constant dense<0.000000e+00> : vector<2x8x8xf32>
      %14 = tpu.matmul %12, %13, %cst {dimension_numbers = #tpu.dot_dimension_numbers<[2], [2], [1], [1], [0, 0, 0, 1, 1, 1], [0], [0]>} : vector<2x8x8xbf16>, vector<2x8x8xbf16>, vector<2x8x8xf32> -> vector<2x8x8xf32>
      %c0_10 = arith.constant 0 : index
      %c0_11 = arith.constant 0 : index
      %c0_12 = arith.constant 0 : index
      %15 = vector.load %arg8[%c0_10, %c0_11, %c0_12] : memref<2x8x1xf32, #tpu.memory_space<vmem>>, vector<2x8x1xf32>
      %cst_13 = arith.constant dense<0xFF800000> : vector<2x8xf32>
      %16 = vector.multi_reduction <maximumf>, %14, %cst_13 [2] : vector<2x8x8xf32> to vector<2x8xf32>
      %17 = vector.shape_cast %16 : vector<2x8xf32> to vector<2x8x1xf32>
      %18 = arith.maximumf %15, %17 : vector<2x8x1xf32>
      %19 = arith.subf %15, %18 : vector<2x8x1xf32>
      %20 = math.exp %19 : vector<2x8x1xf32>
      %21 = vector.broadcast %18 : vector<2x8x1xf32> to vector<2x8x8xf32>
      %22 = arith.subf %14, %21 : vector<2x8x8xf32>
      %23 = math.exp %22 : vector<2x8x8xf32>
      %c0_14 = arith.constant 0 : index
      %c0_15 = arith.constant 0 : index
      %c0_16 = arith.constant 0 : index
      %24 = vector.load %arg9[%c0_14, %c0_15, %c0_16] : memref<2x8x1xf32, #tpu.memory_space<vmem>>, vector<2x8x1xf32>
      %25 = arith.mulf %20, %24 : vector<2x8x1xf32>
      %cst_17 = arith.constant dense<0.000000e+00> : vector<2x8xf32>
      %26 = vector.multi_reduction <add>, %23, %cst_17 [2] : vector<2x8x8xf32> to vector<2x8xf32>
      %27 = vector.shape_cast %26 : vector<2x8xf32> to vector<2x8x1xf32>
      %28 = arith.addf %25, %27 : vector<2x8x1xf32>
      %c0_18 = arith.constant 0 : index
      %c0_19 = arith.constant 0 : index
      %c0_20 = arith.constant 0 : index
      %29 = vector.load %arg9[%c0_18, %c0_19, %c0_20] : memref<2x8x1xf32, #tpu.memory_space<vmem>>, vector<2x8x1xf32>
      tpu.vector_store %arg9[%c0_18, %c0_19, %c0_20], %28 {strides = array<i32>} : memref<2x8x1xf32, #tpu.memory_space<vmem>>, vector<2x8x1xf32>,
      %30 = arith.truncf %23 : vector<2x8x8xf32> to vector<2x8x8xbf16>
      %c0_21 = arith.constant 0 : index
      %c0_22 = arith.constant 0 : index
      %c0_23 = arith.constant 0 : index
      %31 = vector.load %arg5[%c0_21, %c0_22, %c0_23] : memref<2x8x8xbf16, #tpu.memory_space<vmem>>, vector<2x8x8xbf16>
      %cst_24 = arith.constant dense<0.000000e+00> : vector<2x8x8xf32>
      %32 = tpu.matmul %30, %31, %cst_24 {dimension_numbers = #tpu.dot_dimension_numbers<[2], [1], [1], [2], [0, 0, 0, 1, 1, 2], [0], [0]>} : vector<2x8x8xbf16>, vector<2x8x8xbf16>, vector<2x8x8xf32> -> vector<2x8x8xf32>
      %c0_25 = arith.constant 0 : index
      %c0_26 = arith.constant 0 : index
      %c0_27 = arith.constant 0 : index
      %33 = vector.load %arg10[%c0_25, %c0_26, %c0_27] : memref<2x8x8xf32, #tpu.memory_space<vmem>>, vector<2x8x8xf32>
      %34 = vector.broadcast %20 : vector<2x8x1xf32> to vector<2x8x8xf32>
      %35 = arith.mulf %34, %33 : vector<2x8x8xf32>
      %36 = arith.addf %35, %32 : vector<2x8x8xf32>
      %c0_28 = arith.constant 0 : index
      %c0_29 = arith.constant 0 : index
      %c0_30 = arith.constant 0 : index
      %37 = vector.load %arg10[%c0_28, %c0_29, %c0_30] : memref<2x8x8xf32, #tpu.memory_space<vmem>>, vector<2x8x8xf32>
      tpu.vector_store %arg10[%c0_28, %c0_29, %c0_30], %36 {strides = array<i32>} : memref<2x8x8xf32, #tpu.memory_space<vmem>>, vector<2x8x8xf32>,
      %c0_31 = arith.constant 0 : index
      %c0_32 = arith.constant 0 : index
      %c0_33 = arith.constant 0 : index
      %38 = vector.load %arg8[%c0_31, %c0_32, %c0_33] : memref<2x8x1xf32, #tpu.memory_space<vmem>>, vector<2x8x1xf32>
      tpu.vector_store %arg8[%c0_31, %c0_32, %c0_33], %18 {strides = array<i32>} : memref<2x8x1xf32, #tpu.memory_space<vmem>>, vector<2x8x1xf32>,
    } else {
    }
    %6 = arith.cmpi eq, %arg2, %arg1 : i32
    %7 = arith.extui %6 : i1 to i32
    %c0_i32_2 = arith.constant 0 : i32
    %8 = arith.cmpi ne, %7, %c0_i32_2 : i32
    scf.if %8 {
      %c0 = arith.constant 0 : index
      %c0_5 = arith.constant 0 : index
      %c0_6 = arith.constant 0 : index
      %12 = vector.load %arg7[%c0, %c0_5, %c0_6] : memref<2x8x8xbf16, #tpu.memory_space<vmem>>, vector<2x8x8xbf16>
      %c0_7 = arith.constant 0 : index
      %c0_8 = arith.constant 0 : index
      %c0_9 = arith.constant 0 : index
      %13 = vector.load %arg4[%c0_7, %c0_8, %c0_9] : memref<2x8x8xbf16, #tpu.memory_space<vmem>>, vector<2x8x8xbf16>
      %cst = arith.constant dense<0.000000e+00> : vector<2x8x8xf32>
      %14 = tpu.matmul %12, %13, %cst {dimension_numbers = #tpu.dot_dimension_numbers<[2], [2], [1], [1], [0, 0, 0, 1, 1, 1], [0], [0]>} : vector<2x8x8xbf16>, vector<2x8x8xbf16>, vector<2x8x8xf32> -> vector<2x8x8xf32>
      %15 = tpu.iota {dimensions = array<i32: 0>} : vector<8x8xi32>
      %16 = tpu.iota {dimensions = array<i32: 1>} : vector<8x8xi32>
      %17 = arith.cmpi sle, %16, %15 : vector<8x8xi32>
      %18 = vector.shape_cast %17 : vector<8x8xi1> to vector<1x8x8xi1>
      %cst_10 = arith.constant -1.000000e+30 : f32
      %19 = vector.shape_cast %18 : vector<1x8x8xi1> to vector<1x8x8xi1>
      %20 = vector.broadcast %19 : vector<1x8x8xi1> to vector<2x8x8xi1>
      %21 = vector.broadcast %cst_10 : f32 to vector<2x8x8xf32>
      %22 = arith.select %20, %14, %21 : vector<2x8x8xi1>, vector<2x8x8xf32>
      %c0_11 = arith.constant 0 : index
      %c0_12 = arith.constant 0 : index
      %c0_13 = arith.constant 0 : index
      %23 = vector.load %arg8[%c0_11, %c0_12, %c0_13] : memref<2x8x1xf32, #tpu.memory_space<vmem>>, vector<2x8x1xf32>
      %cst_14 = arith.constant dense<0xFF800000> : vector<2x8xf32>
      %24 = vector.multi_reduction <maximumf>, %22, %cst_14 [2] : vector<2x8x8xf32> to vector<2x8xf32>
      %25 = vector.shape_cast %24 : vector<2x8xf32> to vector<2x8x1xf32>
      %26 = arith.maximumf %23, %25 : vector<2x8x1xf32>
      %27 = arith.subf %23, %26 : vector<2x8x1xf32>
      %28 = math.exp %27 : vector<2x8x1xf32>
      %29 = vector.broadcast %26 : vector<2x8x1xf32> to vector<2x8x8xf32>
      %30 = arith.subf %22, %29 : vector<2x8x8xf32>
      %31 = math.exp %30 : vector<2x8x8xf32>
      %cst_15 = arith.constant 0.000000e+00 : f32
      %32 = vector.shape_cast %18 : vector<1x8x8xi1> to vector<1x8x8xi1>
      %33 = vector.broadcast %32 : vector<1x8x8xi1> to vector<2x8x8xi1>
      %34 = vector.broadcast %cst_15 : f32 to vector<2x8x8xf32>
      %35 = arith.select %33, %31, %34 : vector<2x8x8xi1>, vector<2x8x8xf32>
      %c0_16 = arith.constant 0 : index
      %c0_17 = arith.constant 0 : index
      %c0_18 = arith.constant 0 : index
      %36 = vector.load %arg9[%c0_16, %c0_17, %c0_18] : memref<2x8x1xf32, #tpu.memory_space<vmem>>, vector<2x8x1xf32>
      %37 = arith.mulf %28, %36 : vector<2x8x1xf32>
      %cst_19 = arith.constant dense<0.000000e+00> : vector<2x8xf32>
      %38 = vector.multi_reduction <add>, %35, %cst_19 [2] : vector<2x8x8xf32> to vector<2x8xf32>
      %39 = vector.shape_cast %38 : vector<2x8xf32> to vector<2x8x1xf32>
      %40 = arith.addf %37, %39 : vector<2x8x1xf32>
      %c0_20 = arith.constant 0 : index
      %c0_21 = arith.constant 0 : index
      %c0_22 = arith.constant 0 : index
      %41 = vector.load %arg9[%c0_20, %c0_21, %c0_22] : memref<2x8x1xf32, #tpu.memory_space<vmem>>, vector<2x8x1xf32>
      tpu.vector_store %arg9[%c0_20, %c0_21, %c0_22], %40 {strides = array<i32>} : memref<2x8x1xf32, #tpu.memory_space<vmem>>, vector<2x8x1xf32>,
      %42 = arith.truncf %35 : vector<2x8x8xf32> to vector<2x8x8xbf16>
      %c0_23 = arith.constant 0 : index
      %c0_24 = arith.constant 0 : index
      %c0_25 = arith.constant 0 : index
      %43 = vector.load %arg5[%c0_23, %c0_24, %c0_25] : memref<2x8x8xbf16, #tpu.memory_space<vmem>>, vector<2x8x8xbf16>
      %cst_26 = arith.constant dense<0.000000e+00> : vector<2x8x8xf32>
      %44 = tpu.matmul %42, %43, %cst_26 {dimension_numbers = #tpu.dot_dimension_numbers<[2], [1], [1], [2], [0, 0, 0, 1, 1, 2], [0], [0]>} : vector<2x8x8xbf16>, vector<2x8x8xbf16>, vector<2x8x8xf32> -> vector<2x8x8xf32>
      %c0_27 = arith.constant 0 : index
      %c0_28 = arith.constant 0 : index
      %c0_29 = arith.constant 0 : index
      %45 = vector.load %arg10[%c0_27, %c0_28, %c0_29] : memref<2x8x8xf32, #tpu.memory_space<vmem>>, vector<2x8x8xf32>
      %46 = vector.broadcast %28 : vector<2x8x1xf32> to vector<2x8x8xf32>
      %47 = arith.mulf %46, %45 : vector<2x8x8xf32>
      %48 = arith.addf %47, %44 : vector<2x8x8xf32>
      %c0_30 = arith.constant 0 : index
      %c0_31 = arith.constant 0 : index
      %c0_32 = arith.constant 0 : index
      %49 = vector.load %arg10[%c0_30, %c0_31, %c0_32] : memref<2x8x8xf32, #tpu.memory_space<vmem>>, vector<2x8x8xf32>
      tpu.vector_store %arg10[%c0_30, %c0_31, %c0_32], %48 {strides = array<i32>} : memref<2x8x8xf32, #tpu.memory_space<vmem>>, vector<2x8x8xf32>,
      %c0_33 = arith.constant 0 : index
      %c0_34 = arith.constant 0 : index
      %c0_35 = arith.constant 0 : index
      %50 = vector.load %arg8[%c0_33, %c0_34, %c0_35] : memref<2x8x1xf32, #tpu.memory_space<vmem>>, vector<2x8x1xf32>
      tpu.vector_store %arg8[%c0_33, %c0_34, %c0_35], %26 {strides = array<i32>} : memref<2x8x1xf32, #tpu.memory_space<vmem>>, vector<2x8x1xf32>,
    } else {
    }
    %c0_i32_3 = arith.constant 0 : i32
    %9 = arith.cmpi eq, %arg2, %c0_i32_3 : i32
    %10 = arith.extui %9 : i1 to i32
    %c0_i32_4 = arith.constant 0 : i32
    %11 = arith.cmpi ne, %10, %c0_i32_4 : i32
    scf.if %11 {
      %c0 = arith.constant 0 : index
      %c0_5 = arith.constant 0 : index
      %c0_6 = arith.constant 0 : index
      %12 = vector.load %arg9[%c0, %c0_5, %c0_6] : memref<2x8x1xf32, #tpu.memory_space<vmem>>, vector<2x8x1xf32>
      %13 = tpu.reciprocal %12 {approx = true} : vector<2x8x1xf32> -> vector<2x8x1xf32>
      %c0_7 = arith.constant 0 : index
      %c0_8 = arith.constant 0 : index
      %c0_9 = arith.constant 0 : index
      %14 = vector.load %arg10[%c0_7, %c0_8, %c0_9] : memref<2x8x8xf32, #tpu.memory_space<vmem>>, vector<2x8x8xf32>
      %15 = vector.broadcast %13 : vector<2x8x1xf32> to vector<2x8x8xf32>
      %16 = arith.mulf %14, %15 : vector<2x8x8xf32>
      %17 = arith.truncf %16 : vector<2x8x8xf32> to vector<2x8x8xbf16>
      %c0_10 = arith.constant 0 : index
      %c0_11 = arith.constant 0 : index
      %c0_12 = arith.constant 0 : index
      %18 = vector.load %arg6[%c0_10, %c0_11, %c0_12] : memref<2x8x8xbf16, #tpu.memory_space<vmem>>, vector<2x8x8xbf16>
      tpu.vector_store %arg6[%c0_10, %c0_11, %c0_12], %17 {strides = array<i32>} : memref<2x8x8xbf16, #tpu.memory_space<vmem>>, vector<2x8x8xbf16>,
    } else {
    }
    return
  }
  func.func @transform_0(%arg0: i32, %arg1: i32, %arg2: i32) -> (i32, i32, i32) {
    %c0_i32 = arith.constant 0 : i32
    %c0_i32_0 = arith.constant 0 : i32
    return %arg0, %arg1, %c0_i32 : i32, i32, i32
  }
  func.func @transform_1(%arg0: i32, %arg1: i32, %arg2: i32) -> (i32, i32, i32) {
    %0 = arith.minsi %arg2, %arg1 : i32
    %c0_i32 = arith.constant 0 : i32
    %c0_i32_0 = arith.constant 0 : i32
    return %arg0, %0, %c0_i32 : i32, i32, i32
  }
  func.func @transform_2(%arg0: i32, %arg1: i32, %arg2: i32) -> (i32, i32, i32) {
    %0 = arith.minsi %arg2, %arg1 : i32
    %c0_i32 = arith.constant 0 : i32
    %c0_i32_0 = arith.constant 0 : i32
    return %arg0, %0, %c0_i32 : i32, i32, i32
  }
  func.func @transform_3(%arg0: i32, %arg1: i32, %arg2: i32) -> (i32, i32, i32) {
    %c0_i32 = arith.constant 0 : i32
    %c0_i32_0 = arith.constant 0 : i32
    return %arg0, %arg1, %c0_i32 : i32, i32, i32
  }
}

module attributes {stable_mosaic.version = 11 : i64} {
  func.func @_linear_residual_kernel(%arg0: i32, %arg1: i32, %arg2: memref<16x32xbf16, #tpu.memory_space<vmem>>, %arg3: memref<32x32xbf16, #tpu.memory_space<vmem>>, %arg4: memref<1x32xf32, #tpu.memory_space<vmem>>, %arg5: memref<16x32xf32, #tpu.memory_space<vmem>>, %arg6: memref<16x32xf32, #tpu.memory_space<vmem>>) attributes {dimension_semantics = [#tpu.dimension_semantics<parallel>, #tpu.dimension_semantics<parallel>], iteration_bounds = array<i64: 1, 1>, scalar_prefetch = 0 : i64, scratch_operands = 0 : i64, tpu.core_type = #tpu.core_type<tc>, window_params = [{transform_indices = @transform_0, window_bounds = array<i64: 16, 32>}, {transform_indices = @transform_1, window_bounds = array<i64: 32, 32>}, {transform_indices = @transform_2, window_bounds = array<i64: 1, 32>}, {transform_indices = @transform_3, window_bounds = array<i64: 16, 32>}, {transform_indices = @transform_4, window_bounds = array<i64: 16, 32>}]} {
    %c0 = arith.constant 0 : index
    %c0_0 = arith.constant 0 : index
    %0 = vector.load %arg2[%c0, %c0_0] : memref<16x32xbf16, #tpu.memory_space<vmem>>, vector<16x32xbf16>
    %c0_1 = arith.constant 0 : index
    %c0_2 = arith.constant 0 : index
    %1 = vector.load %arg3[%c0_1, %c0_2] : memref<32x32xbf16, #tpu.memory_space<vmem>>, vector<32x32xbf16>
    %cst = arith.constant dense<0.000000e+00> : vector<16x32xf32>
    %2 = tpu.matmul %0, %1, %cst {dimension_numbers = #tpu.dot_dimension_numbers<[1], [0], [0], [1], [0, 0, 1, 1], [], []>} : vector<16x32xbf16>, vector<32x32xbf16>, vector<16x32xf32> -> vector<16x32xf32>
    %c0_3 = arith.constant 0 : index
    %c0_4 = arith.constant 0 : index
    %3 = vector.load %arg5[%c0_3, %c0_4] : memref<16x32xf32, #tpu.memory_space<vmem>>, vector<16x32xf32>
    %4 = arith.addf %3, %2 : vector<16x32xf32>
    %c0_5 = arith.constant 0 : index
    %c0_6 = arith.constant 0 : index
    %5 = vector.load %arg4[%c0_5, %c0_6] : memref<1x32xf32, #tpu.memory_space<vmem>>, vector<1x32xf32>
    %6 = vector.broadcast %5 : vector<1x32xf32> to vector<16x32xf32>
    %7 = arith.addf %4, %6 : vector<16x32xf32>
    %c0_7 = arith.constant 0 : index
    %c0_8 = arith.constant 0 : index
    %8 = vector.load %arg6[%c0_7, %c0_8] : memref<16x32xf32, #tpu.memory_space<vmem>>, vector<16x32xf32>
    tpu.vector_store %arg6[%c0_7, %c0_8], %7 {strides = array<i32>} : memref<16x32xf32, #tpu.memory_space<vmem>>, vector<16x32xf32>,
    return
  }
  func.func @transform_0(%arg0: i32, %arg1: i32) -> (i32, i32) {
    %c0_i32 = arith.constant 0 : i32
    %c0_i32_0 = arith.constant 0 : i32
    return %arg0, %c0_i32 : i32, i32
  }
  func.func @transform_1(%arg0: i32, %arg1: i32) -> (i32, i32) {
    %c0_i32 = arith.constant 0 : i32
    %c0_i32_0 = arith.constant 0 : i32
    return %c0_i32, %arg1 : i32, i32
  }
  func.func @transform_2(%arg0: i32, %arg1: i32) -> (i32, i32) {
    %c0_i32 = arith.constant 0 : i32
    %c0_i32_0 = arith.constant 0 : i32
    return %c0_i32, %arg1 : i32, i32
  }
  func.func @transform_3(%arg0: i32, %arg1: i32) -> (i32, i32) {
    %c0_i32 = arith.constant 0 : i32
    return %arg0, %arg1 : i32, i32
  }
  func.func @transform_4(%arg0: i32, %arg1: i32) -> (i32, i32) {
    %c0_i32 = arith.constant 0 : i32
    return %arg0, %arg1 : i32, i32
  }
}

module attributes {stable_mosaic.version = 11 : i64} {
  func.func @_ln_mlp_kernel(%arg0: i32, %arg1: i32, %arg2: memref<16x32xf32, #tpu.memory_space<vmem>>, %arg3: memref<1x32xf32, #tpu.memory_space<vmem>>, %arg4: memref<1x32xf32, #tpu.memory_space<vmem>>, %arg5: memref<32x128xbf16, #tpu.memory_space<vmem>>, %arg6: memref<1x128xf32, #tpu.memory_space<vmem>>, %arg7: memref<128x32xbf16, #tpu.memory_space<vmem>>, %arg8: memref<1x32xf32, #tpu.memory_space<vmem>>, %arg9: memref<16x32xf32, #tpu.memory_space<vmem>>, %arg10: memref<16x32xbf16, #tpu.memory_space<vmem>>) attributes {dimension_semantics = [#tpu.dimension_semantics<parallel>, #tpu.dimension_semantics<arbitrary>], iteration_bounds = array<i64: 1, 1>, scalar_prefetch = 0 : i64, scratch_operands = 1 : i64, tpu.core_type = #tpu.core_type<tc>, window_params = [{transform_indices = @transform_0, window_bounds = array<i64: 16, 32>}, {pipeline_mode = #tpu.pipeline_mode<synchronous>, transform_indices = @transform_1, window_bounds = array<i64: 1, 32>}, {pipeline_mode = #tpu.pipeline_mode<synchronous>, transform_indices = @transform_2, window_bounds = array<i64: 1, 32>}, {transform_indices = @transform_3, window_bounds = array<i64: 32, 128>}, {transform_indices = @transform_4, window_bounds = array<i64: 1, 128>}, {transform_indices = @transform_5, window_bounds = array<i64: 128, 32>}, {pipeline_mode = #tpu.pipeline_mode<synchronous>, transform_indices = @transform_6, window_bounds = array<i64: 1, 32>}, {transform_indices = @transform_7, window_bounds = array<i64: 16, 32>}]} {
    %c0_i32 = arith.constant 0 : i32
    %0 = arith.cmpi eq, %arg1, %c0_i32 : i32
    %1 = arith.extui %0 : i1 to i32
    %c0_i32_0 = arith.constant 0 : i32
    %2 = arith.cmpi ne, %1, %c0_i32_0 : i32
    scf.if %2 {
      %c0_17 = arith.constant 0 : index
      %c0_18 = arith.constant 0 : index
      %28 = vector.load %arg2[%c0_17, %c0_18] : memref<16x32xf32, #tpu.memory_space<vmem>>, vector<16x32xf32>
      %c0_19 = arith.constant 0 : index
      %c0_20 = arith.constant 0 : index
      %29 = vector.load %arg3[%c0_19, %c0_20] : memref<1x32xf32, #tpu.memory_space<vmem>>, vector<1x32xf32>
      %c0_21 = arith.constant 0 : index
      %c0_22 = arith.constant 0 : index
      %30 = vector.load %arg4[%c0_21, %c0_22] : memref<1x32xf32, #tpu.memory_space<vmem>>, vector<1x32xf32>
      %cst_23 = arith.constant dense<0.000000e+00> : vector<16xf32>
      %31 = vector.multi_reduction <add>, %28, %cst_23 [1] : vector<16x32xf32> to vector<16xf32>
      %32 = vector.shape_cast %31 : vector<16xf32> to vector<16x1xf32>
      %cst_24 = arith.constant 3.200000e+01 : f32
      %33 = vector.broadcast %cst_24 : f32 to vector<16x1xf32>
      %34 = arith.divf %32, %33 : vector<16x1xf32>
      %35 = vector.broadcast %34 : vector<16x1xf32> to vector<16x32xf32>
      %36 = arith.subf %28, %35 : vector<16x32xf32>
      %37 = arith.mulf %36, %36 : vector<16x32xf32>
      %cst_25 = arith.constant dense<0.000000e+00> : vector<16xf32>
      %38 = vector.multi_reduction <add>, %37, %cst_25 [1] : vector<16x32xf32> to vector<16xf32>
      %39 = vector.shape_cast %38 : vector<16xf32> to vector<16x1xf32>
      %cst_26 = arith.constant 3.200000e+01 : f32
      %40 = vector.broadcast %cst_26 : f32 to vector<16x1xf32>
      %41 = arith.divf %39, %40 : vector<16x1xf32>
      %42 = vector.broadcast %34 : vector<16x1xf32> to vector<16x32xf32>
      %43 = arith.subf %28, %42 : vector<16x32xf32>
      %cst_27 = arith.constant 9.99999974E-6 : f32
      %44 = vector.broadcast %cst_27 : f32 to vector<16x1xf32>
      %45 = arith.addf %41, %44 : vector<16x1xf32>
      %46 = math.rsqrt %45 : vector<16x1xf32>
      %47 = vector.broadcast %46 : vector<16x1xf32> to vector<16x32xf32>
      %48 = arith.mulf %43, %47 : vector<16x32xf32>
      %49 = vector.broadcast %29 : vector<1x32xf32> to vector<16x32xf32>
      %50 = arith.mulf %48, %49 : vector<16x32xf32>
      %51 = vector.broadcast %30 : vector<1x32xf32> to vector<16x32xf32>
      %52 = arith.addf %50, %51 : vector<16x32xf32>
      %53 = arith.truncf %52 : vector<16x32xf32> to vector<16x32xbf16>
      %c0_28 = arith.constant 0 : index
      %c0_29 = arith.constant 0 : index
      %54 = vector.load %arg10[%c0_28, %c0_29] : memref<16x32xbf16, #tpu.memory_space<vmem>>, vector<16x32xbf16>
      tpu.vector_store %arg10[%c0_28, %c0_29], %53 {strides = array<i32>} : memref<16x32xbf16, #tpu.memory_space<vmem>>, vector<16x32xbf16>,
      %c0_30 = arith.constant 0 : index
      %c0_31 = arith.constant 0 : index
      %55 = vector.load %arg2[%c0_30, %c0_31] : memref<16x32xf32, #tpu.memory_space<vmem>>, vector<16x32xf32>
      %c0_32 = arith.constant 0 : index
      %c0_33 = arith.constant 0 : index
      %56 = vector.load %arg8[%c0_32, %c0_33] : memref<1x32xf32, #tpu.memory_space<vmem>>, vector<1x32xf32>
      %57 = vector.broadcast %56 : vector<1x32xf32> to vector<16x32xf32>
      %58 = arith.addf %55, %57 : vector<16x32xf32>
      %c0_34 = arith.constant 0 : index
      %c0_35 = arith.constant 0 : index
      %59 = vector.load %arg9[%c0_34, %c0_35] : memref<16x32xf32, #tpu.memory_space<vmem>>, vector<16x32xf32>
      tpu.vector_store %arg9[%c0_34, %c0_35], %58 {strides = array<i32>} : memref<16x32xf32, #tpu.memory_space<vmem>>, vector<16x32xf32>,
    } else {
    }
    %c0 = arith.constant 0 : index
    %c0_1 = arith.constant 0 : index
    %3 = vector.load %arg10[%c0, %c0_1] : memref<16x32xbf16, #tpu.memory_space<vmem>>, vector<16x32xbf16>
    %c0_2 = arith.constant 0 : index
    %c0_3 = arith.constant 0 : index
    %4 = vector.load %arg5[%c0_2, %c0_3] : memref<32x128xbf16, #tpu.memory_space<vmem>>, vector<32x128xbf16>
    %cst = arith.constant dense<0.000000e+00> : vector<16x128xf32>
    %5 = tpu.matmul %3, %4, %cst {dimension_numbers = #tpu.dot_dimension_numbers<[1], [0], [0], [1], [0, 0, 1, 1], [], []>} : vector<16x32xbf16>, vector<32x128xbf16>, vector<16x128xf32> -> vector<16x128xf32>
    %c0_4 = arith.constant 0 : index
    %c0_5 = arith.constant 0 : index
    %6 = vector.load %arg6[%c0_4, %c0_5] : memref<1x128xf32, #tpu.memory_space<vmem>>, vector<1x128xf32>
    %7 = vector.broadcast %6 : vector<1x128xf32> to vector<16x128xf32>
    %8 = arith.addf %5, %7 : vector<16x128xf32>
    %cst_6 = arith.constant 5.000000e-01 : f32
    %9 = vector.broadcast %cst_6 : f32 to vector<16x128xf32>
    %10 = arith.mulf %9, %8 : vector<16x128xf32>
    %cst_7 = arith.constant 4.471500e-02 : f32
    %11 = vector.broadcast %cst_7 : f32 to vector<16x128xf32>
    %12 = arith.mulf %11, %8 : vector<16x128xf32>
    %13 = arith.mulf %12, %8 : vector<16x128xf32>
    %14 = arith.mulf %13, %8 : vector<16x128xf32>
    %15 = arith.addf %8, %14 : vector<16x128xf32>
    %cst_8 = arith.constant 0.797884583 : f32
    %16 = vector.broadcast %cst_8 : f32 to vector<16x128xf32>
    %17 = arith.mulf %16, %15 : vector<16x128xf32>
    %18 = math.tanh %17 : vector<16x128xf32>
    %cst_9 = arith.constant 1.000000e+00 : f32
    %19 = vector.broadcast %cst_9 : f32 to vector<16x128xf32>
    %20 = arith.addf %19, %18 : vector<16x128xf32>
    %21 = arith.mulf %10, %20 : vector<16x128xf32>
    %c0_10 = arith.constant 0 : index
    %c0_11 = arith.constant 0 : index
    %22 = vector.load %arg9[%c0_10, %c0_11] : memref<16x32xf32, #tpu.memory_space<vmem>>, vector<16x32xf32>
    %23 = arith.truncf %21 : vector<16x128xf32> to vector<16x128xbf16>
    %c0_12 = arith.constant 0 : index
    %c0_13 = arith.constant 0 : index
    %24 = vector.load %arg7[%c0_12, %c0_13] : memref<128x32xbf16, #tpu.memory_space<vmem>>, vector<128x32xbf16>
    %cst_14 = arith.constant dense<0.000000e+00> : vector<16x32xf32>
    %25 = tpu.matmul %23, %24, %cst_14 {dimension_numbers = #tpu.dot_dimension_numbers<[1], [0], [0], [1], [0, 0, 1, 1], [], []>} : vector<16x128xbf16>, vector<128x32xbf16>, vector<16x32xf32> -> vector<16x32xf32>
    %26 = arith.addf %22, %25 : vector<16x32xf32>
    %c0_15 = arith.constant 0 : index
    %c0_16 = arith.constant 0 : index
    %27 = vector.load %arg9[%c0_15, %c0_16] : memref<16x32xf32, #tpu.memory_space<vmem>>, vector<16x32xf32>
    tpu.vector_store %arg9[%c0_15, %c0_16], %26 {strides = array<i32>} : memref<16x32xf32, #tpu.memory_space<vmem>>, vector<16x32xf32>,
    return
  }
  func.func @transform_0(%arg0: i32, %arg1: i32) -> (i32, i32) {
    %c0_i32 = arith.constant 0 : i32
    %c0_i32_0 = arith.constant 0 : i32
    return %arg0, %c0_i32 : i32, i32
  }
  func.func @transform_1(%arg0: i32, %arg1: i32) -> (i32, i32) {
    %c0_i32 = arith.constant 0 : i32
    %c0_i32_0 = arith.constant 0 : i32
    %c0_i32_1 = arith.constant 0 : i32
    return %c0_i32, %c0_i32_0 : i32, i32
  }
  func.func @transform_2(%arg0: i32, %arg1: i32) -> (i32, i32) {
    %c0_i32 = arith.constant 0 : i32
    %c0_i32_0 = arith.constant 0 : i32
    %c0_i32_1 = arith.constant 0 : i32
    return %c0_i32, %c0_i32_0 : i32, i32
  }
  func.func @transform_3(%arg0: i32, %arg1: i32) -> (i32, i32) {
    %c0_i32 = arith.constant 0 : i32
    %c0_i32_0 = arith.constant 0 : i32
    return %c0_i32, %arg1 : i32, i32
  }
  func.func @transform_4(%arg0: i32, %arg1: i32) -> (i32, i32) {
    %c0_i32 = arith.constant 0 : i32
    %c0_i32_0 = arith.constant 0 : i32
    return %c0_i32, %arg1 : i32, i32
  }
  func.func @transform_5(%arg0: i32, %arg1: i32) -> (i32, i32) {
    %c0_i32 = arith.constant 0 : i32
    %c0_i32_0 = arith.constant 0 : i32
    return %arg1, %c0_i32 : i32, i32
  }
  func.func @transform_6(%arg0: i32, %arg1: i32) -> (i32, i32) {
    %c0_i32 = arith.constant 0 : i32
    %c0_i32_0 = arith.constant 0 : i32
    %c0_i32_1 = arith.constant 0 : i32
    return %c0_i32, %c0_i32_0 : i32, i32
  }
  func.func @transform_7(%arg0: i32, %arg1: i32) -> (i32, i32) {
    %c0_i32 = arith.constant 0 : i32
    %c0_i32_0 = arith.constant 0 : i32
    return %arg0, %c0_i32 : i32, i32
  }
}

module attributes {stable_mosaic.version = 11 : i64} {
  func.func @_ln_matmul_kernel(%arg0: i32, %arg1: i32, %arg2: memref<16x32xf32, #tpu.memory_space<vmem>>, %arg3: memref<1x32xf32, #tpu.memory_space<vmem>>, %arg4: memref<1x32xf32, #tpu.memory_space<vmem>>, %arg5: memref<32x1024xbf16, #tpu.memory_space<vmem>>, %arg6: memref<16x1024xf32, #tpu.memory_space<vmem>>, %arg7: memref<16x32xbf16, #tpu.memory_space<vmem>>) attributes {dimension_semantics = [#tpu.dimension_semantics<parallel>, #tpu.dimension_semantics<arbitrary>], iteration_bounds = array<i64: 1, 1>, scalar_prefetch = 0 : i64, scratch_operands = 1 : i64, tpu.core_type = #tpu.core_type<tc>, window_params = [{transform_indices = @transform_0, window_bounds = array<i64: 16, 32>}, {pipeline_mode = #tpu.pipeline_mode<synchronous>, transform_indices = @transform_1, window_bounds = array<i64: 1, 32>}, {pipeline_mode = #tpu.pipeline_mode<synchronous>, transform_indices = @transform_2, window_bounds = array<i64: 1, 32>}, {transform_indices = @transform_3, window_bounds = array<i64: 32, 1024>}, {transform_indices = @transform_4, window_bounds = array<i64: 16, 1024>}]} {
    %c0_i32 = arith.constant 0 : i32
    %0 = arith.cmpi eq, %arg1, %c0_i32 : i32
    %1 = arith.extui %0 : i1 to i32
    %c0_i32_0 = arith.constant 0 : i32
    %2 = arith.cmpi ne, %1, %c0_i32_0 : i32
    scf.if %2 {
      %c0_6 = arith.constant 0 : index
      %c0_7 = arith.constant 0 : index
      %7 = vector.load %arg2[%c0_6, %c0_7] : memref<16x32xf32, #tpu.memory_space<vmem>>, vector<16x32xf32>
      %c0_8 = arith.constant 0 : index
      %c0_9 = arith.constant 0 : index
      %8 = vector.load %arg3[%c0_8, %c0_9] : memref<1x32xf32, #tpu.memory_space<vmem>>, vector<1x32xf32>
      %c0_10 = arith.constant 0 : index
      %c0_11 = arith.constant 0 : index
      %9 = vector.load %arg4[%c0_10, %c0_11] : memref<1x32xf32, #tpu.memory_space<vmem>>, vector<1x32xf32>
      %cst_12 = arith.constant dense<0.000000e+00> : vector<16xf32>
      %10 = vector.multi_reduction <add>, %7, %cst_12 [1] : vector<16x32xf32> to vector<16xf32>
      %11 = vector.shape_cast %10 : vector<16xf32> to vector<16x1xf32>
      %cst_13 = arith.constant 3.200000e+01 : f32
      %12 = vector.broadcast %cst_13 : f32 to vector<16x1xf32>
      %13 = arith.divf %11, %12 : vector<16x1xf32>
      %14 = vector.broadcast %13 : vector<16x1xf32> to vector<16x32xf32>
      %15 = arith.subf %7, %14 : vector<16x32xf32>
      %16 = arith.mulf %15, %15 : vector<16x32xf32>
      %cst_14 = arith.constant dense<0.000000e+00> : vector<16xf32>
      %17 = vector.multi_reduction <add>, %16, %cst_14 [1] : vector<16x32xf32> to vector<16xf32>
      %18 = vector.shape_cast %17 : vector<16xf32> to vector<16x1xf32>
      %cst_15 = arith.constant 3.200000e+01 : f32
      %19 = vector.broadcast %cst_15 : f32 to vector<16x1xf32>
      %20 = arith.divf %18, %19 : vector<16x1xf32>
      %21 = vector.broadcast %13 : vector<16x1xf32> to vector<16x32xf32>
      %22 = arith.subf %7, %21 : vector<16x32xf32>
      %cst_16 = arith.constant 9.99999974E-6 : f32
      %23 = vector.broadcast %cst_16 : f32 to vector<16x1xf32>
      %24 = arith.addf %20, %23 : vector<16x1xf32>
      %25 = math.rsqrt %24 : vector<16x1xf32>
      %26 = vector.broadcast %25 : vector<16x1xf32> to vector<16x32xf32>
      %27 = arith.mulf %22, %26 : vector<16x32xf32>
      %28 = vector.broadcast %8 : vector<1x32xf32> to vector<16x32xf32>
      %29 = arith.mulf %27, %28 : vector<16x32xf32>
      %30 = vector.broadcast %9 : vector<1x32xf32> to vector<16x32xf32>
      %31 = arith.addf %29, %30 : vector<16x32xf32>
      %32 = arith.truncf %31 : vector<16x32xf32> to vector<16x32xbf16>
      %c0_17 = arith.constant 0 : index
      %c0_18 = arith.constant 0 : index
      %33 = vector.load %arg7[%c0_17, %c0_18] : memref<16x32xbf16, #tpu.memory_space<vmem>>, vector<16x32xbf16>
      tpu.vector_store %arg7[%c0_17, %c0_18], %32 {strides = array<i32>} : memref<16x32xbf16, #tpu.memory_space<vmem>>, vector<16x32xbf16>,
    } else {
    }
    %c0 = arith.constant 0 : index
    %c0_1 = arith.constant 0 : index
    %3 = vector.load %arg7[%c0, %c0_1] : memref<16x32xbf16, #tpu.memory_space<vmem>>, vector<16x32xbf16>
    %c0_2 = arith.constant 0 : index
    %c0_3 = arith.constant 0 : index
    %4 = vector.load %arg5[%c0_2, %c0_3] : memref<32x1024xbf16, #tpu.memory_space<vmem>>, vector<32x1024xbf16>
    %cst = arith.constant dense<0.000000e+00> : vector<16x1024xf32>
    %5 = tpu.matmul %3, %4, %cst {dimension_numbers = #tpu.dot_dimension_numbers<[1], [0], [0], [1], [0, 0, 1, 1], [], []>} : vector<16x32xbf16>, vector<32x1024xbf16>, vector<16x1024xf32> -> vector<16x1024xf32>
    %c0_4 = arith.constant 0 : index
    %c0_5 = arith.constant 0 : index
    %6 = vector.load %arg6[%c0_4, %c0_5] : memref<16x1024xf32, #tpu.memory_space<vmem>>, vector<16x1024xf32>
    tpu.vector_store %arg6[%c0_4, %c0_5], %5 {strides = array<i32>} : memref<16x1024xf32, #tpu.memory_space<vmem>>, vector<16x1024xf32>,
    return
  }
  func.func @transform_0(%arg0: i32, %arg1: i32) -> (i32, i32) {
    %c0_i32 = arith.constant 0 : i32
    %c0_i32_0 = arith.constant 0 : i32
    return %arg0, %c0_i32 : i32, i32
  }
  func.func @transform_1(%arg0: i32, %arg1: i32) -> (i32, i32) {
    %c0_i32 = arith.constant 0 : i32
    %c0_i32_0 = arith.constant 0 : i32
    %c0_i32_1 = arith.constant 0 : i32
    return %c0_i32, %c0_i32_0 : i32, i32
  }
  func.func @transform_2(%arg0: i32, %arg1: i32) -> (i32, i32) {
    %c0_i32 = arith.constant 0 : i32
    %c0_i32_0 = arith.constant 0 : i32
    %c0_i32_1 = arith.constant 0 : i32
    return %c0_i32, %c0_i32_0 : i32, i32
  }
  func.func @transform_3(%arg0: i32, %arg1: i32) -> (i32, i32) {
    %c0_i32 = arith.constant 0 : i32
    %c0_i32_0 = arith.constant 0 : i32
    return %c0_i32, %arg1 : i32, i32
  }
  func.func @transform_4(%arg0: i32, %arg1: i32) -> (i32, i32) {
    %c0_i32 = arith.constant 0 : i32
    return %arg0, %arg1 : i32, i32
  }
}

</mosaic_0001>

<llo_original>
// kernel: gpt_forward.9
$region0: #{gpt_forward.9}
  #allocation0 [shape = 'u32[]', space=smem, size = 0x4, offset = 0x4, fixed_abs, tag = 'smem constant byte address 0x4 - core index']
  #allocation1 [shape = 'u32[72,128]{1,0:T(1,128)}', space=vmem, size = 0x9000, scoped, tag = 'internal scratch']
  #allocation2 [shape = 'bf16[16,32]{1,0:T(8,128)(2,1)}', space=vmem, size = 0x1000, scoped, tag = 'scratch operand']
  %s0 = inlined_call_operand.vmem [shape: f32[16,32], index: 0, kind: input, shape index: {}]
  %s1 = inlined_call_operand.vmem [shape: f32[1,32], index: 1, kind: input, shape index: {}]
  %s2 = inlined_call_operand.vmem [shape: f32[1,32], index: 2, kind: input, shape index: {}]
  %s3 = inlined_call_operand.vmem [shape: bf16[32,96], index: 3, kind: input, shape index: {}]
  %s4 = inlined_call_operand.vmem [shape: f32[1,96], index: 4, kind: input, shape index: {}]
  %s5 = inlined_call_operand.vmem [shape: bf16[16,96], index: 5, kind: output, shape index: {}]
  %s6 = sld [smem:[#allocation0]]
  $region34: #{gpt_forward.9} parent=0
    _
  %s8 = ssub.s32 1, %s6
  %s9 = scalar_select 0, %s8, %s6
  // Predicated region
  $region2: #{gpt_forward.9} parent=0 // pred_check
    _
  $region3: #{gpt_forward.9} parent=0 // pred_check_branch
    %11 = sbr.rel (0) target = $region5
  $region4: #{gpt_forward.9} parent=0 // pred_region
    _
  $region5: #{gpt_forward.9} parent=0 // pred_fallthru
    _
  // Predicated region
  $region6: #{gpt_forward.9} parent=0 // pred_check
    _
  $region7: #{gpt_forward.9} parent=0 // pred_check_branch
    %13 = sbr.rel (0) target = $region9
  $region8: #{gpt_forward.9} parent=0 // pred_region
    _
  $region9: #{gpt_forward.9} parent=0 // pred_fallthru
    _
  // Predicated region
  $region10: #{gpt_forward.9} parent=0 // pred_check
    _
  $region11: #{gpt_forward.9} parent=0 // pred_check_branch
    %15 = sbr.rel (0) target = $region13
  $region12: #{gpt_forward.9} parent=0 // pred_region
    _
  $region13: #{gpt_forward.9} parent=0 // pred_fallthru
    _
  // Predicated region
  $region14: #{gpt_forward.9} parent=0 // pred_check
    _
  $region15: #{gpt_forward.9} parent=0 // pred_check_branch
    %17 = sbr.rel (0) target = $region17
  $region16: #{gpt_forward.9} parent=0 // pred_region
    _
  $region17: #{gpt_forward.9} parent=0 // pred_fallthru
    _
  // Predicated region
  $region18: #{gpt_forward.9} parent=0 // pred_check
    _
  $region19: #{gpt_forward.9} parent=0 // pred_check_branch
    %19 = sbr.rel (0) target = $region21
  $region20: #{gpt_forward.9} parent=0 // pred_region
    _
  $region21: #{gpt_forward.9} parent=0 // pred_fallthru
    _
  %p21 = scmp.eq.s32.totalorder 0, 0
  // Predicated region
  $region22: #{gpt_forward.9} parent=0 // pred_check
    %p22 = pneg %p21
  $region23: #{gpt_forward.9} parent=0 // pred_check_branch
    %24 = sbr.rel (%p22) target = $region25
  $region24: #{gpt_forward.9} parent=0 // pred_region
    %v25 = vld [vmem:[%s0] sm:$0xff]
    %v26 = vld [vmem:[%s0 + $0x8] sm:$0xff]
    %v27 = vld [vmem:[%s1] sm:$0x1]
    %v28 = vld [vmem:[%s2] sm:$0x1]
    %vm29 = vcmask 261120
    %v30 = vsel %vm29, %v25, 0.0
    %31 = vadd.xlane.f32.xlu0 %v30
    %v32 = vpop.xlane.xlu0 %31
    %v33 = vsel %vm29, %v26, 0.0
    %34 = vadd.xlane.f32.xlu0 %v33
    %v35 = vpop.xlane.xlu0 %34
    %v36 = vrcp.pop 32.0
    %v37 = vmul.f32 32.0, %v36
    %v38 = vsub.f32 1.0, %v37
    %v39 = vmul.f32 %v36, %v38
    %v40 = vadd.f32 %v36, %v39
    %vm41 = vweird.f32 %v36
    %v42 = vsel %vm41, %v36, %v40
    %v43 = vmul.f32 %v32, %v42
    %v44 = vmul.f32 %v35, %v42
    %v45 = vsub.f32 %v25, %v43
    %v46 = vsub.f32 %v26, %v44
    %v47 = vmul.f32 %v45, %v45
    %v48 = vmul.f32 %v46, %v46
    %v49 = vsel %vm29, %v47, 0.0
    %50 = vadd.xlane.f32.xlu0 %v49
    %v51 = vpop.xlane.xlu0 %50
    %v52 = vsel %vm29, %v48, 0.0
    %53 = vadd.xlane.f32.xlu0 %v52
    %v54 = vpop.xlane.xlu0 %53
    %v55 = vmul.f32 %v51, %v42
    %v56 = vmul.f32 %v54, %v42
    %v57 = vadd.f32 %v55, 1e-05
    %v58 = vadd.f32 %v56, 1e-05
    %v59 = vrsqrt.pop %v57
    %v60 = vmul.f32 %v59, %v57
    %v61 = vmul.f32 %v60, %v59
    %v62 = vmul.f32 0.5, %v61
    %v63 = vsub.f32 1.5, %v62
    %v64 = vmul.f32 %v59, %v63
    %vm65 = vweird.f32 %v57
    %vm66 = vweird.f32 %v59
    %vm67 = vmor %vm65, %vm66
    %v68 = vsel %vm67, %v59, %v64
    %v69 = vrsqrt.pop %v58
    %v70 = vmul.f32 %v69, %v58
    %v71 = vmul.f32 %v70, %v69
    %v72 = vmul.f32 0.5, %v71
    %v73 = vsub.f32 1.5, %v72
    %v74 = vmul.f32 %v69, %v73
    %vm75 = vweird.f32 %v58
    %vm76 = vweird.f32 %v69
    %vm77 = vmor %vm75, %vm76
    %v78 = vsel %vm77, %v69, %v74
    %v79 = vmul.f32 %v45, %v68
    %v80 = vmul.f32 %v46, %v78
    %v82 = vperm.slane %v27, 0
    %v84 = vmul.f32 %v79, %v82
    %v85 = vmul.f32 %v80, %v82
    %v87 = vperm.slane %v28, 0
    %v89 = vadd.f32 %v84, %v87
    %v90 = vadd.f32 %v85, %v87
    %v91 = vpack.c.bf16 %v89, %v89
    %v92 = vpack.c.bf16 %v90, %v90
    %vm93 = vcmask 257024
    %94 = vst.msk [vmem:[#allocation2] sm:$0xf] %vm93, %v91
    %95 = vst.msk [vmem:[#allocation2 + $0x4] sm:$0xf] %vm93, %v92
  $region25: #{gpt_forward.9} parent=0 // pred_fallthru
    _
  %v96 = vld [vmem:[#allocation2] sm:$0xf]
  %v97 = vld [vmem:[#allocation2 + $0x4] sm:$0xf]
  %v98 = vld [vmem:[%s3] sm:$0xf]
  %v99 = vld [vmem:[%s3 + $0x4] sm:$0xf]
  %v100 = vld [vmem:[%s3 + $0x8] sm:$0xf]
  %v101 = vld [vmem:[%s3 + $0xc] sm:$0xf]
  %v102 = vld [vmem:[%s4] sm:$0x1]
  %v104 = vperm.slane %v102, 0
  %v108 = vunpack.c.l.b16 %v96
  %v109 = vunpack.c.l.b16 %v97
  %v110 = vpack.c.b16 %v109, %v108
  %v115 = vunpack.c.l.b16 %v98
  %v116 = vunpack.c.l.b16 %v99
  %v117 = vunpack.c.l.b16 %v100
  %v118 = vunpack.c.l.b16 %v101
  %v119 = vpack.c.b16 %v116, %v115
  %v120 = vpack.c.b16 %v118, %v117
  %vm123 = vcmask 261120
  %v125 = vsel %vm123, %v110, 0
  %127 = vmatpush.bf16.msra.mxu0 0
  %128 = vmatpush.bf16.msra.mxu0 0
  %129 = vmatpush.bf16.msra.mxu0 0
  %130 = vmatpush.bf16.msra.mxu0 0
  %131 = vmatpush.bf16.msra.mxu0 0
  %132 = vmatpush.bf16.msra.mxu0 0
  %133 = vmatpush.bf16.msra.mxu0 %v120
  %134 = vmatpush.bf16.msra.mxu0 %v119
  %135 = vmatmul.bf16.gmra.mxu0 %v125
  %v136 = vpop.f32.mrf.mxu0
  %v137 = vadd.f32 %v104, %v136
  %v138 = vpop.f32.mrf.mxu0
  %v139 = vadd.f32 %v104, %v138
  %140 = vdwg.mxu0
  %v141 = vpack.c.bf16 %v137, %v137
  %v142 = vpack.c.bf16 %v139, %v139
  %vm143 = vcmask 781312
  %144 = vst.msk [vmem:[%s5] sm:$0xf] %vm143, %v141
  %145 = vst.msk [vmem:[%s5 + $0x4] sm:$0xf] %vm143, %v142
  // Predicated region
  $region26: #{gpt_forward.9} parent=0 // pred_check
    _
  $region27: #{gpt_forward.9} parent=0 // pred_check_branch
    %147 = sbr.rel (0) target = $region29
  $region28: #{gpt_forward.9} parent=0 // pred_region
    _
  $region29: #{gpt_forward.9} parent=0 // pred_fallthru
    _
  // Predicated region
  $region30: #{gpt_forward.9} parent=0 // pred_check
    _
  $region31: #{gpt_forward.9} parent=0 // pred_check_branch
    %149 = sbr.rel (0) target = $region33
  $region32: #{gpt_forward.9} parent=0 // pred_region
    _
  $region33: #{gpt_forward.9} parent=0 // pred_fallthru
    _

// kernel: gpt_forward.11
$region0: #{gpt_forward.11}
  #allocation0 [shape = 'u32[]', space=smem, size = 0x4, offset = 0x4, fixed_abs, tag = 'smem constant byte address 0x4 - core index']
  #allocation1 [shape = 'u32[72,128]{1,0:T(1,128)}', space=vmem, size = 0x9000, scoped, tag = 'internal scratch']
  %s0 = inlined_call_operand.vmem [shape: bf16[16,32], index: 0, kind: input, shape index: {}]
  %s1 = inlined_call_operand.vmem [shape: bf16[32,32], index: 1, kind: input, shape index: {}]
  %s2 = inlined_call_operand.vmem [shape: f32[1,32], index: 2, kind: input, shape index: {}]
  %s3 = inlined_call_operand.vmem [shape: f32[16,32], index: 3, kind: input, shape index: {}]
  %s4 = inlined_call_operand.vmem [shape: f32[16,32], index: 4, kind: output, shape index: {}]
  %s5 = sld [smem:[#allocation0]]
  $region26: #{gpt_forward.11} parent=0
    _
  %s7 = ssub.s32 1, %s5
  %s8 = scalar_select 0, %s7, %s5
  // Predicated region
  $region2: #{gpt_forward.11} parent=0 // pred_check
    _
  $region3: #{gpt_forward.11} parent=0 // pred_check_branch
    %10 = sbr.rel (0) target = $region5
  $region4: #{gpt_forward.11} parent=0 // pred_region
    _
  $region5: #{gpt_forward.11} parent=0 // pred_fallthru
    _
  // Predicated region
  $region6: #{gpt_forward.11} parent=0 // pred_check
    _
  $region7: #{gpt_forward.11} parent=0 // pred_check_branch
    %12 = sbr.rel (0) target = $region9
  $region8: #{gpt_forward.11} parent=0 // pred_region
    _
  $region9: #{gpt_forward.11} parent=0 // pred_fallthru
    _
  // Predicated region
  $region10: #{gpt_forward.11} parent=0 // pred_check
    _
  $region11: #{gpt_forward.11} parent=0 // pred_check_branch
    %14 = sbr.rel (0) target = $region13
  $region12: #{gpt_forward.11} parent=0 // pred_region
    _
  $region13: #{gpt_forward.11} parent=0 // pred_fallthru
    _
  // Predicated region
  $region14: #{gpt_forward.11} parent=0 // pred_check
    _
  $region15: #{gpt_forward.11} parent=0 // pred_check_branch
    %16 = sbr.rel (0) target = $region17
  $region16: #{gpt_forward.11} parent=0 // pred_region
    _
  $region17: #{gpt_forward.11} parent=0 // pred_fallthru
    _
  %v18 = vld [vmem:[%s0] sm:$0xf]
  %v19 = vld [vmem:[%s0 + $0x4] sm:$0xf]
  %v20 = vld [vmem:[%s1] sm:$0xf]
  %v21 = vld [vmem:[%s1 + $0x4] sm:$0xf]
  %v22 = vld [vmem:[%s1 + $0x8] sm:$0xf]
  %v23 = vld [vmem:[%s1 + $0xc] sm:$0xf]
  %v26 = vunpack.c.l.b16 %v18
  %v27 = vunpack.c.l.b16 %v19
  %v28 = vpack.c.b16 %v27, %v26
  %v33 = vunpack.c.l.b16 %v20
  %v34 = vunpack.c.l.b16 %v21
  %v35 = vunpack.c.l.b16 %v22
  %v36 = vunpack.c.l.b16 %v23
  %v37 = vpack.c.b16 %v34, %v33
  %v38 = vpack.c.b16 %v36, %v35
  %vm41 = vcmask 261120
  %v43 = vsel %vm41, %v28, 0
  %45 = vmatpush.bf16.msra.mxu0 0
  %46 = vmatpush.bf16.msra.mxu0 0
  %47 = vmatpush.bf16.msra.mxu0 0
  %48 = vmatpush.bf16.msra.mxu0 0
  %49 = vmatpush.bf16.msra.mxu0 0
  %50 = vmatpush.bf16.msra.mxu0 0
  %51 = vmatpush.bf16.msra.mxu0 %v38
  %52 = vmatpush.bf16.msra.mxu0 %v37
  %53 = vmatmul.bf16.gmra.mxu0 %v43
  %v54 = vpop.f32.mrf.mxu0
  %v55 = vadd.f32 0.0, %v54
  %v56 = vpop.f32.mrf.mxu0
  %v57 = vadd.f32 0.0, %v56
  %58 = vdwg.mxu0
  %v59 = vld [vmem:[%s3] sm:$0xff]
  %v60 = vld [vmem:[%s3 + $0x8] sm:$0xff]
  %v61 = vadd.f32 %v59, %v55
  %v62 = vadd.f32 %v60, %v57
  %v63 = vld [vmem:[%s2] sm:$0x1]
  %v65 = vperm.slane %v63, 0
  %v67 = vadd.f32 %v61, %v65
  %v68 = vadd.f32 %v62, %v65
  %69 = vst.msk [vmem:[%s4] sm:$0xff] %vm41, %v67
  %70 = vst.msk [vmem:[%s4 + $0x8] sm:$0xff] %vm41, %v68
  // Predicated region
  $region18: #{gpt_forward.11} parent=0 // pred_check
    _
  $region19: #{gpt_forward.11} parent=0 // pred_check_branch
    %72 = sbr.rel (0) target = $region21
  $region20: #{gpt_forward.11} parent=0 // pred_region
    _
  $region21: #{gpt_forward.11} parent=0 // pred_fallthru
    _
  // Predicated region
  $region22: #{gpt_forward.11} parent=0 // pred_check
    _
  $region23: #{gpt_forward.11} parent=0 // pred_check_branch
    %74 = sbr.rel (0) target = $region25
  $region24: #{gpt_forward.11} parent=0 // pred_region
    _
  $region25: #{gpt_forward.11} parent=0 // pred_fallthru
    _

// kernel: gpt_forward.10
$region0: #{gpt_forward.10}
  #allocation0 [shape = 'u32[]', space=smem, size = 0x4, offset = 0x4, fixed_abs, tag = 'smem constant byte address 0x4 - core index']
  #allocation1 [shape = 'u32[72,128]{1,0:T(1,128)}', space=vmem, size = 0x9000, scoped, tag = 'internal scratch']
  #allocation2 [shape = 'bf16[2,8,8]{2,1,0:T(8,128)(2,1)}', space=vmem, size = 0x1000, scoped, tag = 'scratch operand']
  #allocation3 [shape = 'f32[2,8,1]{2,1,0:T(8,128)}', space=vmem, size = 0x2000, scoped, tag = 'scratch operand']
  #allocation4 [shape = 'f32[2,8,1]{2,1,0:T(8,128)}', space=vmem, size = 0x2000, scoped, tag = 'scratch operand']
  #allocation5 [shape = 'f32[2,8,8]{2,1,0:T(8,128)}', space=vmem, size = 0x2000, scoped, tag = 'scratch operand']
  %s0 = inlined_call_operand.vmem [shape: bf16[8,8,8], index: 0, kind: input, shape index: {}]
  %s1 = inlined_call_operand.vmem [shape: bf16[8,8,8], index: 1, kind: input, shape index: {}]
  %s2 = inlined_call_operand.vmem [shape: bf16[8,8,8], index: 2, kind: input, shape index: {}]
  %s3 = inlined_call_operand.vmem [shape: bf16[8,8,8], index: 3, kind: output, shape index: {}]
  %s4 = sld [smem:[#allocation0]]
  $region61: #{gpt_forward.10} parent=0
    _
  %s6 = ssub.s32 1, %s4
  %s7 = scalar_select 0, %s6, %s4
  loop: start=0, step=1, limit=6
  $region2: #{gpt_forward.10} parent=0 // loop_pre_header
    _
  $region3: #{gpt_forward.10} parent=0 // loop_header
    %s9 = sphi 0, %s13
    %p10 = scmp.ge.s32.totalorder %s9, 6
    %s16 = sphi 0, %s35
    %s17 = sphi 0, %s31
    %s18 = sphi 0, %s27
    %s19 = sphi 0, %s16
    %s20 = sphi 0, %s17
    %s21 = sphi 0, %s18
    %s22 = sphi 0, %s19
    %s23 = sphi 0, %s20
    %s24 = sphi 0, %s21
    %s40 = sphi 0, %s42
    %s43 = sphi 0, %s40
    %s44 = sphi 0, %s43
    %s60 = sphi 0, %s44
    %s72 = sphi 0, %s74
    %s75 = sphi 0, %s72
    %s76 = sphi 0, %s75
    %s92 = sphi 0, %s76
    %s104 = sphi 0, %s106
    %s107 = sphi 0, %s104
    %s108 = sphi 0, %s107
    %s124 = sphi 0, %s108
    %s132 = sphi 0, %s134
    %s135 = sphi 0, %s132
    %s136 = sphi 0, %s135
    %s152 = sphi 0, %s136
  $region4: #{gpt_forward.10} parent=0 // loop_header_branch
    %12 = sbr.rel (%p10) target = $region8
  $region5: #{gpt_forward.10} parent=0 // loop_body
    %s14 = ssub.s32 %s9, 1
    %s15 = ssub.s32 %s9, 2
    %s25 = sadd.s32 1, %s18
    %p26 = scmp.ge.s32.totalorder %s25, 1
    %s27 = scalar_select %p26, 0, %s25
    %s28 = sadd.s32 1, %s17
    %s29 = scalar_select %p26, %s28, %s17
    %p30 = scmp.ge.s32.totalorder %s29, 1
    %s31 = scalar_select %p30, 0, %s29
    %s32 = sadd.s32 1, %s16
    %s33 = scalar_select %p30, %s32, %s16
    %p34 = scmp.ge.s32.totalorder %s33, 4
    %s35 = scalar_select %p34, 0, %s33
    %s36 = ssub.s32 %s16, %s35
    %s37 = ssub.s32 %s17, %s31
    %s38 = sor.u32 %s36, %s37
    %p39 = scmp.eq.s32.totalorder %s38, 0
    %s41 = sadd.s32 %s40, 1
    %s42 = scalar_select %p39, %s40, %s41
    %p45 = pneg %p39
    %p46 = scmp.eq.s32.totalorder %s9, 3
    %p47 = por %p45, %p46
    %p48 = scmp.ne.s32.totalorder %s40, %s43
    %p49 = scmp.eq.s32.totalorder %s9, 0
    %p50 = por %p48, %p49
    %p51 = scmp.ne.s32.totalorder %s40, %s43
    %p52 = scmp.eq.s32.totalorder %s14, 3
    %p53 = por %p51, %p52
    %p54 = scmp.ne.s32.totalorder %s43, %s44
    %p55 = scmp.eq.s32.totalorder %s14, 0
    %p56 = por %p54, %p55
    %p57 = scmp.ne.s32.totalorder %s43, %s44
    %p58 = scmp.eq.s32.totalorder %s15, 3
    %p59 = por %p57, %p58
    %p61 = scmp.ne.s32.totalorder %s44, %s60
    %p62 = scmp.eq.s32.totalorder %s15, 0
    %p63 = por %p61, %p62
    %p64 = scmp.lt.s32.totalorder %s18, %s17
    %s65 = scalar_select %p64, %s18, %s17
    %p66 = scmp.lt.s32.totalorder %s27, %s31
    %s67 = scalar_select %p66, %s27, %s31
    %s68 = ssub.s32 %s16, %s35
    %s69 = ssub.s32 %s65, %s67
    %s70 = sor.u32 %s68, %s69
    %p71 = scmp.eq.s32.totalorder %s70, 0
    %s73 = sadd.s32 %s72, 1
    %s74 = scalar_select %p71, %s72, %s73
    %p77 = pneg %p71
    %p78 = scmp.eq.s32.totalorder %s9, 3
    %p79 = por %p77, %p78
    %p80 = scmp.ne.s32.totalorder %s72, %s75
    %p81 = scmp.eq.s32.totalorder %s9, 0
    %p82 = por %p80, %p81
    %p83 = scmp.ne.s32.totalorder %s72, %s75
    %p84 = scmp.eq.s32.totalorder %s14, 3
    %p85 = por %p83, %p84
    %p86 = scmp.ne.s32.totalorder %s75, %s76
    %p87 = scmp.eq.s32.totalorder %s14, 0
    %p88 = por %p86, %p87
    %p89 = scmp.ne.s32.totalorder %s75, %s76
    %p90 = scmp.eq.s32.totalorder %s15, 3
    %p91 = por %p89, %p90
    %p93 = scmp.ne.s32.totalorder %s76, %s92
    %p94 = scmp.eq.s32.totalorder %s15, 0
    %p95 = por %p93, %p94
    %p96 = scmp.lt.s32.totalorder %s18, %s17
    %s97 = scalar_select %p96, %s18, %s17
    %p98 = scmp.lt.s32.totalorder %s27, %s31
    %s99 = scalar_select %p98, %s27, %s31
    %s100 = ssub.s32 %s16, %s35
    %s101 = ssub.s32 %s97, %s99
    %s102 = sor.u32 %s100, %s101
    %p103 = scmp.eq.s32.totalorder %s102, 0
    %s105 = sadd.s32 %s104, 1
    %s106 = scalar_select %p103, %s104, %s105
    %p109 = pneg %p103
    %p110 = scmp.eq.s32.totalorder %s9, 3
    %p111 = por %p109, %p110
    %p112 = scmp.ne.s32.totalorder %s104, %s107
    %p113 = scmp.eq.s32.totalorder %s9, 0
    %p114 = por %p112, %p113
    %p115 = scmp.ne.s32.totalorder %s104, %s107
    %p116 = scmp.eq.s32.totalorder %s14, 3
    %p117 = por %p115, %p116
    %p118 = scmp.ne.s32.totalorder %s107, %s108
    %p119 = scmp.eq.s32.totalorder %s14, 0
    %p120 = por %p118, %p119
    %p121 = scmp.ne.s32.totalorder %s107, %s108
    %p122 = scmp.eq.s32.totalorder %s15, 3
    %p123 = por %p121, %p122
    %p125 = scmp.ne.s32.totalorder %s108, %s124
    %p126 = scmp.eq.s32.totalorder %s15, 0
    %p127 = por %p125, %p126
    %s128 = ssub.s32 %s16, %s35
    %s129 = ssub.s32 %s17, %s31
    %s130 = sor.u32 %s128, %s129
    %p131 = scmp.eq.s32.totalorder %s130, 0
    %s133 = sadd.s32 %s132, 1
    %s134 = scalar_select %p131, %s132, %s133
    %p137 = pneg %p131
    %p138 = scmp.eq.s32.totalorder %s9, 3
    %p139 = por %p137, %p138
    %p140 = scmp.ne.s32.totalorder %s132, %s135
    %p141 = scmp.eq.s32.totalorder %s9, 0
    %p142 = por %p140, %p141
    %p143 = scmp.ne.s32.totalorder %s132, %s135
    %p144 = scmp.eq.s32.totalorder %s14, 3
    %p145 = por %p143, %p144
    %p146 = scmp.ne.s32.totalorder %s135, %s136
    %p147 = scmp.eq.s32.totalorder %s14, 0
    %p148 = por %p146, %p147
    %p149 = scmp.ne.s32.totalorder %s135, %s136
    %p150 = scmp.eq.s32.totalorder %s15, 3
    %p151 = por %p149, %p150
    %p153 = scmp.ne.s32.totalorder %s136, %s152
    %p154 = scmp.eq.s32.totalorder %s15, 0
    %p155 = por %p153, %p154
    %p156 = scmp.le.s32.totalorder 1, %s9
    %p157 = scmp.lt.s32.totalorder %s9, 5
    %p158 = pnand %p156, %p157
    %p159 = pneg %p158
    // Predicated region
    $region9: #{gpt_forward.10} parent=5 // pred_check
      _
    $region10: #{gpt_forward.10} parent=5 // pred_check_branch
      %161 = sbr.rel (%p158) target = $region12
    $region11: #{gpt_forward.10} parent=5 // pred_region
      %s162 = ssub.s32 %s9, 1
    $region12: #{gpt_forward.10} parent=5 // pred_fallthru
      _
    %p163 = scmp.lt.s32.totalorder %s9, 4
    // Predicated region
    $region13: #{gpt_forward.10} parent=5 // pred_check
      %p164 = pneg %p163
    $region14: #{gpt_forward.10} parent=5 // pred_check_branch
      %166 = sbr.rel (%p164) target = $region16
    $region15: #{gpt_forward.10} parent=5 // pred_region
      // Predicated region
      $region17: #{gpt_forward.10} parent=15 // pred_check
        %p167 = pneg %p50
      $region18: #{gpt_forward.10} parent=15 // pred_check_branch
        %169 = sbr.rel (%p167) target = $region20
      $region19: #{gpt_forward.10} parent=15 // pred_region
        %s170 = smul.u32 2, %s16
        %p171 = scmp.lt.s32.totalorder %s170, 7
        %s172 = scalar_select %p171, %s170, 7
        %p173 = scmp.lt.s32.totalorder %s17, 0
        %s174 = scalar_select %p173, %s17, 0
        %s175 = sadd.s32 %s174, %s172
        %s176 = smul.addr %s175, 4
        %s177 = scalar_lea.vmem %s0, %s176
        %s178 = smul.u32 2, %s16
      $region20: #{gpt_forward.10} parent=15 // pred_fallthru
        _
      // Predicated region
      $region21: #{gpt_forward.10} parent=15 // pred_check
        %p179 = pneg %p82
      $region22: #{gpt_forward.10} parent=15 // pred_check_branch
        %181 = sbr.rel (%p179) target = $region24
      $region23: #{gpt_forward.10} parent=15 // pred_region
        %p182 = scmp.lt.s32.totalorder %s18, %s17
        %s183 = scalar_select %p182, %s18, %s17
        %s184 = smul.u32 2, %s16
        %p185 = scmp.lt.s32.totalorder %s184, 7
        %s186 = scalar_select %p185, %s184, 7
        %p187 = scmp.lt.s32.totalorder %s183, 0
        %s188 = scalar_select %p187, %s183, 0
        %s189 = sadd.s32 %s188, %s186
        %s190 = smul.addr %s189, 4
        %s191 = scalar_lea.vmem %s1, %s190
        %p192 = scmp.lt.s32.totalorder %s18, %s17
        %s193 = scalar_select %p192, %s18, %s17
        %s194 = smul.u32 2, %s16
      $region24: #{gpt_forward.10} parent=15 // pred_fallthru
        _
      // Predicated region
      $region25: #{gpt_forward.10} parent=15 // pred_check
        %p195 = pneg %p114
      $region26: #{gpt_forward.10} parent=15 // pred_check_branch
        %197 = sbr.rel (%p195) target = $region28
      $region27: #{gpt_forward.10} parent=15 // pred_region
        %p198 = scmp.lt.s32.totalorder %s18, %s17
        %s199 = scalar_select %p198, %s18, %s17
        %s200 = smul.u32 2, %s16
        %p201 = scmp.lt.s32.totalorder %s200, 7
        %s202 = scalar_select %p201, %s200, 7
        %p203 = scmp.lt.s32.totalorder %s199, 0
        %s204 = scalar_select %p203, %s199, 0
        %s205 = sadd.s32 %s204, %s202
        %s206 = smul.addr %s205, 4
        %s207 = scalar_lea.vmem %s2, %s206
        %p208 = scmp.lt.s32.totalorder %s18, %s17
        %s209 = scalar_select %p208, %s18, %s17
        %s210 = smul.u32 2, %s16
      $region28: #{gpt_forward.10} parent=15 // pred_fallthru
        _
    $region16: #{gpt_forward.10} parent=5 // pred_fallthru
      _
    %p211 = scmp.le.s32.totalorder 1, %s9
    %p212 = scmp.lt.s32.totalorder %s9, 5
    %p213 = pnand %p211, %p212
    %p214 = pneg %p213
    // Predicated region
    $region29: #{gpt_forward.10} parent=5 // pred_check
      _
    $region30: #{gpt_forward.10} parent=5 // pred_check_branch
      %216 = sbr.rel (%p213) target = $region32
    $region31: #{gpt_forward.10} parent=5 // pred_region
      %s217 = ssub.s32 %s9, 1
      %s218 = smul.u32 2, %s19
      %p219 = scmp.lt.s32.totalorder %s218, 7
      %s220 = scalar_select %p219, %s218, 7
      %p221 = scmp.lt.s32.totalorder %s20, 0
      %s222 = scalar_select %p221, %s20, 0
      %s223 = sadd.s32 %s222, %s220
      %s224 = smul.addr %s223, 4
      %s225 = scalar_lea.vmem %s0, %s224
      %p226 = pneg %p56
      %p227 = pneg %p53
      %p228 = scmp.lt.s32.totalorder %s21, %s20
      %s229 = scalar_select %p228, %s21, %s20
      %s230 = smul.u32 2, %s19
      %p231 = scmp.lt.s32.totalorder %s230, 7
      %s232 = scalar_select %p231, %s230, 7
      %p233 = scmp.lt.s32.totalorder %s229, 0
      %s234 = scalar_select %p233, %s229, 0
      %s235 = sadd.s32 %s234, %s232
      %s236 = smul.addr %s235, 4
      %s237 = scalar_lea.vmem %s1, %s236
      %p238 = pneg %p88
      %p239 = pneg %p85
      %p240 = scmp.lt.s32.totalorder %s21, %s20
      %s241 = scalar_select %p240, %s21, %s20
      %s242 = smul.u32 2, %s19
      %p243 = scmp.lt.s32.totalorder %s242, 7
      %s244 = scalar_select %p243, %s242, 7
      %p245 = scmp.lt.s32.totalorder %s241, 0
      %s246 = scalar_select %p245, %s241, 0
      %s247 = sadd.s32 %s246, %s244
      %s248 = smul.addr %s247, 4
      %s249 = scalar_lea.vmem %s2, %s248
      %p250 = pneg %p120
      %p251 = pneg %p117
      %p252 = pneg %p148
      %p253 = pneg %p145
      %s254 = smul.u32 2, %s19
      %p255 = scmp.lt.s32.totalorder %s254, 7
      %s256 = scalar_select %p255, %s254, 7
      %p257 = scmp.lt.s32.totalorder %s20, 0
      %s258 = scalar_select %p257, %s20, 0
      %s259 = sadd.s32 %s258, %s256
      %s260 = smul.addr %s259, 4
      %s261 = scalar_lea.vmem %s3, %s260
      %s262 = smul.u32 2, %s19
      %p263 = scmp.lt.s32.totalorder %s262, 7
      %s264 = scalar_select %p263, %s262, 7
      %p265 = scmp.lt.s32.totalorder %s20, 0
      %s266 = scalar_select %p265, %s20, 0
      %s267 = sadd.s32 %s266, %s264
      %s268 = smul.addr %s267, 4
      %s269 = scalar_lea.vmem %s0, %s268
      %s270 = smul.u32 2, %s19
      %p271 = scmp.lt.s32.totalorder %s21, %s20
      %s272 = scalar_select %p271, %s21, %s20
      %s273 = smul.u32 2, %s19
      %p274 = scmp.lt.s32.totalorder %s273, 7
      %s275 = scalar_select %p274, %s273, 7
      %p276 = scmp.lt.s32.totalorder %s272, 0
      %s277 = scalar_select %p276, %s272, 0
      %s278 = sadd.s32 %s277, %s275
      %s279 = smul.addr %s278, 4
      %s280 = scalar_lea.vmem %s1, %s279
      %p281 = scmp.lt.s32.totalorder %s21, %s20
      %s282 = scalar_select %p281, %s21, %s20
      %s283 = smul.u32 2, %s19
      %p284 = scmp.lt.s32.totalorder %s21, %s20
      %s285 = scalar_select %p284, %s21, %s20
      %s286 = smul.u32 2, %s19
      %p287 = scmp.lt.s32.totalorder %s286, 7
      %s288 = scalar_select %p287, %s286, 7
      %p289 = scmp.lt.s32.totalorder %s285, 0
      %s290 = scalar_select %p289, %s285, 0
      %s291 = sadd.s32 %s290, %s288
      %s292 = smul.addr %s291, 4
      %s293 = scalar_lea.vmem %s2, %s292
      %p294 = scmp.lt.s32.totalorder %s21, %s20
      %s295 = scalar_select %p294, %s21, %s20
      %s296 = smul.u32 2, %s19
      %s297 = smul.u32 2, %s19
      %p298 = scmp.lt.s32.totalorder %s297, 7
      %s299 = scalar_select %p298, %s297, 7
      %p300 = scmp.lt.s32.totalorder %s20, 0
      %s301 = scalar_select %p300, %s20, 0
      %s302 = sadd.s32 %s301, %s299
      %s303 = smul.addr %s302, 4
      %s304 = scalar_lea.vmem %s3, %s303
      %s305 = smul.u32 2, %s19
      %p307 = scmp.eq.s32.totalorder %s21, 0
      // Predicated region
      $region33: #{gpt_forward.10} parent=31 // pred_check
        %p308 = pneg %p307
      $region34: #{gpt_forward.10} parent=31 // pred_check_branch
        %310 = sbr.rel (%p308) target = $region36
      $region35: #{gpt_forward.10} parent=31 // pred_region
        %v311 = vld [vmem:[%s269] sm:$0xf]
        %v312 = vld [vmem:[%s269 + $0x4] sm:$0xf]
        %v313 = vunpack.c.l.bf16 %v311
        %v314 = vunpack.c.l.bf16 %v312
        %v315 = vmul.f32 %v313, 0.35355338
        %v316 = vmul.f32 %v314, 0.35355338
        %v317 = vpack.c.bf16 %v315, %v315
        %v318 = vpack.c.bf16 %v316, %v316
        %vm319 = vcmask 60416
        %320 = vst.msk [vmem:[#allocation2] sm:$0xf] %vm319, %v317
        %321 = vst.msk [vmem:[#allocation2 + $0x4] sm:$0xf] %vm319, %v318
        %vm322 = vcmask 7168
        %323 = vst.msk [vmem:[#allocation3] sm:$0xff] %vm322, -1e+30
        %324 = vst.msk [vmem:[#allocation3 + $0x8] sm:$0xff] %vm322, -1e+30
        %325 = vst.msk [vmem:[#allocation4] sm:$0xff] %vm322, 0.0
        %326 = vst.msk [vmem:[#allocation4 + $0x8] sm:$0xff] %vm322, 0.0
        %vm327 = vcmask 64512
        %328 = vst.msk [vmem:[#allocation5] sm:$0xff] %vm327, 0.0
        %329 = vst.msk [vmem:[#allocation5 + $0x8] sm:$0xff] %vm327, 0.0
      $region36: #{gpt_forward.10} parent=31 // pred_fallthru
        _
      %p330 = scmp.lt.s32.totalorder %s21, %s20
      // Predicated region
      $region37: #{gpt_forward.10} parent=31 // pred_check
        %p331 = pneg %p330
      $region38: #{gpt_forward.10} parent=31 // pred_check_branch
        %333 = sbr.rel (%p331) target = $region40
      $region39: #{gpt_forward.10} parent=31 // pred_region
        %v334 = vld [vmem:[#allocation2] sm:$0xf]
        %v335 = vld [vmem:[#allocation2 + $0x4] sm:$0xf]
        %v336 = vld [vmem:[%s280] sm:$0xf]
        %v337 = vld [vmem:[%s280 + $0x4] sm:$0xf]
        %vm338 = vcmask 64512
        %v340 = vsel %vm338, %v334, 0
        %v343 = vsel %vm338, %v336, 0
        %345 = vmatpush.bf16.xpose.msra.mxu0 0
        %346 = vmatpush.bf16.xpose.msra.mxu0 0
        %347 = vmatpush.bf16.xpose.msra.mxu0 0
        %348 = vmatpush.bf16.xpose.msra.mxu0 0
        %349 = vmatpush.bf16.xpose.msra.mxu0 0
        %350 = vmatpush.bf16.xpose.msra.mxu0 0
        %351 = vmatpush.bf16.xpose.msra.mxu0 0
        %352 = vmatpush.bf16.xpose.msra.mxu0 %v343
        %353 = vmatmul.bf16.gmra.mxu0 %v340
        %v354 = vpop.f32.mrf.mxu0
        %v355 = vadd.f32 0.0, %v354
        %v356 = vpop.f32.mrf.mxu0
        %357 = vdwg.mxu0
        %v359 = vsel %vm338, %v335, 0
        %v362 = vsel %vm338, %v337, 0
        %364 = vmatpush.bf16.xpose.msra.mxu0 0
        %365 = vmatpush.bf16.xpose.msra.mxu0 0
        %366 = vmatpush.bf16.xpose.msra.mxu0 0
        %367 = vmatpush.bf16.xpose.msra.mxu0 0
        %368 = vmatpush.bf16.xpose.msra.mxu0 0
        %369 = vmatpush.bf16.xpose.msra.mxu0 0
        %370 = vmatpush.bf16.xpose.msra.mxu0 0
        %371 = vmatpush.bf16.xpose.msra.mxu0 %v362
        %372 = vmatmul.bf16.gmra.mxu0 %v359
        %v373 = vpop.f32.mrf.mxu0
        %v374 = vadd.f32 0.0, %v373
        %v375 = vpop.f32.mrf.mxu0
        %376 = vdwg.mxu0
        %v377 = vld [vmem:[#allocation3] sm:$0xff]
        %v378 = vld [vmem:[#allocation3 + $0x8] sm:$0xff]
        %v379 = vsel %vm338, %v355, -inf
        %380 = vmax.xlane.f32.xlu0 %v379
        %v381 = vpop.xlane.xlu0 %380
        %v382 = vsel %vm338, %v374, -inf
        %383 = vmax.xlane.f32.xlu0 %v382
        %v384 = vpop.xlane.xlu0 %383
        %v385 = vmax.f32 %v377, %v381
        %v386 = vmax.f32 %v378, %v384
        %v387 = vsub.f32 %v377, %v385
        %v388 = vsub.f32 %v378, %v386
        %v389 = vmul.f32 %v387, 1.442695
        %v390 = vpow.pop %v389
        %v391 = vmul.f32 %v388, 1.442695
        %v392 = vpow.pop %v391
        %394 = vset.pattern.permute.xlu0 0
        %395 = vperm.xlu0 %394, %v385
        %v396 = vpop.permute.xlu0 %395
        %399 = vset.pattern.permute.xlu0 0
        %400 = vperm.xlu0 %399, %v386
        %v401 = vpop.permute.xlu0 %400
        %v403 = vsub.f32 %v355, %v396
        %v404 = vsub.f32 %v374, %v401
        %v405 = vmul.f32 %v403, 1.442695
        %v406 = vpow.pop %v405
        %v407 = vmul.f32 %v404, 1.442695
        %v408 = vpow.pop %v407
        %v409 = vld [vmem:[#allocation4] sm:$0xff]
        %v410 = vld [vmem:[#allocation4 + $0x8] sm:$0xff]
        %v411 = vmul.f32 %v390, %v409
        %v412 = vmul.f32 %v392, %v410
        %v413 = vsel %vm338, %v406, 0.0
        %414 = vadd.xlane.f32.xlu0 %v413
        %v415 = vpop.xlane.xlu0 %414
        %v416 = vsel %vm338, %v408, 0.0
        %417 = vadd.xlane.f32.xlu0 %v416
        %v418 = vpop.xlane.xlu0 %417
        %v419 = vadd.f32 %v411, %v415
        %v420 = vadd.f32 %v412, %v418
        %vm421 = vcmask 7168
        %422 = vst.msk [vmem:[#allocation4] sm:$0xff] %vm421, %v419
        %423 = vst.msk [vmem:[#allocation4 + $0x8] sm:$0xff] %vm421, %v420
        %v424 = vpack.c.bf16 %v406, %v406
        %v425 = vpack.c.bf16 %v408, %v408
        %v426 = vld [vmem:[%s293] sm:$0xf]
        %v427 = vld [vmem:[%s293 + $0x4] sm:$0xf]
        %v429 = vsel %vm338, %v424, 0
        %vm431 = vcmask 1043456
        %v433 = vsel %vm431, %v426, 0
        %435 = vmatpush.bf16.msra.mxu0 0
        %436 = vmatpush.bf16.msra.mxu0 0
        %437 = vmatpush.bf16.msra.mxu0 0
        %438 = vmatpush.bf16.msra.mxu0 0
        %439 = vmatpush.bf16.msra.mxu0 0
        %440 = vmatpush.bf16.msra.mxu0 0
        %441 = vmatpush.bf16.msra.mxu0 0
        %442 = vmatpush.bf16.msra.mxu0 %v433
        %443 = vmatmul.bf16.gmra.mxu0 %v429
        %v444 = vpop.f32.mrf.mxu0
        %v445 = vadd.f32 0.0, %v444
        %v446 = vpop.f32.mrf.mxu0
        %447 = vdwg.mxu0
        %v449 = vsel %vm338, %v425, 0
        %v452 = vsel %vm431, %v427, 0
        %454 = vmatpush.bf16.msra.mxu0 0
        %455 = vmatpush.bf16.msra.mxu0 0
        %456 = vmatpush.bf16.msra.mxu0 0
        %457 = vmatpush.bf16.msra.mxu0 0
        %458 = vmatpush.bf16.msra.mxu0 0
        %459 = vmatpush.bf16.msra.mxu0 0
        %460 = vmatpush.bf16.msra.mxu0 0
        %461 = vmatpush.bf16.msra.mxu0 %v452
        %462 = vmatmul.bf16.gmra.mxu0 %v449
        %v463 = vpop.f32.mrf.mxu0
        %v464 = vadd.f32 0.0, %v463
        %v465 = vpop.f32.mrf.mxu0
        %466 = vdwg.mxu0
        %v467 = vld [vmem:[#allocation5] sm:$0xff]
        %v468 = vld [vmem:[#allocation5 + $0x8] sm:$0xff]
        %470 = vset.pattern.permute.xlu0 0
        %471 = vperm.xlu0 %470, %v390
        %v472 = vpop.permute.xlu0 %471
        %475 = vset.pattern.permute.xlu0 0
        %476 = vperm.xlu0 %475, %v392
        %v477 = vpop.permute.xlu0 %476
        %v479 = vmul.f32 %v472, %v467
        %v480 = vmul.f32 %v477, %v468
        %v481 = vadd.f32 %v479, %v445
        %v482 = vadd.f32 %v480, %v464
        %483 = vst.msk [vmem:[#allocation5] sm:$0xff] %vm338, %v481
        %484 = vst.msk [vmem:[#allocation5 + $0x8] sm:$0xff] %vm338, %v482
        %485 = vst.msk [vmem:[#allocation3] sm:$0xff] %vm421, %v385
        %486 = vst.msk [vmem:[#allocation3 + $0x8] sm:$0xff] %vm421, %v386
      $region40: #{gpt_forward.10} parent=31 // pred_fallthru
        _
      %p487 = scmp.eq.s32.totalorder %s21, %s20
      // Predicated region
      $region41: #{gpt_forward.10} parent=31 // pred_check
        %p488 = pneg %p487
      $region42: #{gpt_forward.10} parent=31 // pred_check_branch
        %490 = sbr.rel (%p488) target = $region44
      $region43: #{gpt_forward.10} parent=31 // pred_region
        %v491 = vld [vmem:[#allocation2] sm:$0xf]
        %v492 = vld [vmem:[#allocation2 + $0x4] sm:$0xf]
        %v493 = vld [vmem:[%s280] sm:$0xf]
        %v494 = vld [vmem:[%s280 + $0x4] sm:$0xf]
        %vm495 = vcmask 64512
        %v497 = vsel %vm495, %v491, 0
        %v500 = vsel %vm495, %v493, 0
        %502 = vmatpush.bf16.xpose.msra.mxu0 0
        %503 = vmatpush.bf16.xpose.msra.mxu0 0
        %504 = vmatpush.bf16.xpose.msra.mxu0 0
        %505 = vmatpush.bf16.xpose.msra.mxu0 0
        %506 = vmatpush.bf16.xpose.msra.mxu0 0
        %507 = vmatpush.bf16.xpose.msra.mxu0 0
        %508 = vmatpush.bf16.xpose.msra.mxu0 0
        %509 = vmatpush.bf16.xpose.msra.mxu0 %v500
        %510 = vmatmul.bf16.gmra.mxu0 %v497
        %v511 = vpop.f32.mrf.mxu0
        %v512 = vadd.f32 0.0, %v511
        %v513 = vpop.f32.mrf.mxu0
        %514 = vdwg.mxu0
        %v516 = vsel %vm495, %v492, 0
        %v519 = vsel %vm495, %v494, 0
        %521 = vmatpush.bf16.xpose.msra.mxu0 0
        %522 = vmatpush.bf16.xpose.msra.mxu0 0
        %523 = vmatpush.bf16.xpose.msra.mxu0 0
        %524 = vmatpush.bf16.xpose.msra.mxu0 0
        %525 = vmatpush.bf16.xpose.msra.mxu0 0
        %526 = vmatpush.bf16.xpose.msra.mxu0 0
        %527 = vmatpush.bf16.xpose.msra.mxu0 0
        %528 = vmatpush.bf16.xpose.msra.mxu0 %v519
        %529 = vmatmul.bf16.gmra.mxu0 %v516
        %v530 = vpop.f32.mrf.mxu0
        %v531 = vadd.f32 0.0, %v530
        %v532 = vpop.f32.mrf.mxu0
        %533 = vdwg.mxu0
        %v534 = vlaneseq
        %v535 = vshrl.u32 %v534, 7
        %v536 = vlaneseq
        %v537 = vand.u32 %v536, 127
        %vm538 = vcmp.le.s32.totalorder %v537, %v535
        %v539 = vsel %vm538, 1, 0
        %vm540 = vcmp.eq.s32.totalorder %v539, 1
        %v541 = vsel %vm540, %v512, -1e+30
        %v542 = vsel %vm540, %v531, -1e+30
        %v543 = vld [vmem:[#allocation3] sm:$0xff]
        %v544 = vld [vmem:[#allocation3 + $0x8] sm:$0xff]
        %v545 = vsel %vm495, %v541, -inf
        %546 = vmax.xlane.f32.xlu0 %v545
        %v547 = vpop.xlane.xlu0 %546
        %v548 = vsel %vm495, %v542, -inf
        %549 = vmax.xlane.f32.xlu0 %v548
        %v550 = vpop.xlane.xlu0 %549
        %v551 = vmax.f32 %v543, %v547
        %v552 = vmax.f32 %v544, %v550
        %v553 = vsub.f32 %v543, %v551
        %v554 = vsub.f32 %v544, %v552
        %v555 = vmul.f32 %v553, 1.442695
        %v556 = vpow.pop %v555
        %v557 = vmul.f32 %v554, 1.442695
        %v558 = vpow.pop %v557
        %560 = vset.pattern.permute.xlu0 0
        %561 = vperm.xlu0 %560, %v551
        %v562 = vpop.permute.xlu0 %561
        %565 = vset.pattern.permute.xlu0 0
        %566 = vperm.xlu0 %565, %v552
        %v567 = vpop.permute.xlu0 %566
        %v569 = vsub.f32 %v541, %v562
        %v570 = vsub.f32 %v542, %v567
        %v571 = vmul.f32 %v569, 1.442695
        %v572 = vpow.pop %v571
        %v573 = vmul.f32 %v570, 1.442695
        %v574 = vpow.pop %v573
        %v575 = vsel %vm540, %v572, 0.0
        %v576 = vsel %vm540, %v574, 0.0
        %v577 = vld [vmem:[#allocation4] sm:$0xff]
        %v578 = vld [vmem:[#allocation4 + $0x8] sm:$0xff]
        %v579 = vmul.f32 %v556, %v577
        %v580 = vmul.f32 %v558, %v578
        %v581 = vsel %vm495, %v575, 0.0
        %582 = vadd.xlane.f32.xlu0 %v581
        %v583 = vpop.xlane.xlu0 %582
        %v584 = vsel %vm495, %v576, 0.0
        %585 = vadd.xlane.f32.xlu0 %v584
        %v586 = vpop.xlane.xlu0 %585
        %v587 = vadd.f32 %v579, %v583
        %v588 = vadd.f32 %v580, %v586
        %vm589 = vcmask 7168
        %590 = vst.msk [vmem:[#allocation4] sm:$0xff] %vm589, %v587
        %591 = vst.msk [vmem:[#allocation4 + $0x8] sm:$0xff] %vm589, %v588
        %v592 = vpack.c.bf16 %v575, %v575
        %v593 = vpack.c.bf16 %v576, %v576
        %v594 = vld [vmem:[%s293] sm:$0xf]
        %v595 = vld [vmem:[%s293 + $0x4] sm:$0xf]
        %v597 = vsel %vm495, %v592, 0
        %vm599 = vcmask 1043456
        %v601 = vsel %vm599, %v594, 0
        %603 = vmatpush.bf16.msra.mxu0 0
        %604 = vmatpush.bf16.msra.mxu0 0
        %605 = vmatpush.bf16.msra.mxu0 0
        %606 = vmatpush.bf16.msra.mxu0 0
        %607 = vmatpush.bf16.msra.mxu0 0
        %608 = vmatpush.bf16.msra.mxu0 0
        %609 = vmatpush.bf16.msra.mxu0 0
        %610 = vmatpush.bf16.msra.mxu0 %v601
        %611 = vmatmul.bf16.gmra.mxu0 %v597
        %v612 = vpop.f32.mrf.mxu0
        %v613 = vadd.f32 0.0, %v612
        %v614 = vpop.f32.mrf.mxu0
        %615 = vdwg.mxu0
        %v617 = vsel %vm495, %v593, 0
        %v620 = vsel %vm599, %v595, 0
        %622 = vmatpush.bf16.msra.mxu0 0
        %623 = vmatpush.bf16.msra.mxu0 0
        %624 = vmatpush.bf16.msra.mxu0 0
        %625 = vmatpush.bf16.msra.mxu0 0
        %626 = vmatpush.bf16.msra.mxu0 0
        %627 = vmatpush.bf16.msra.mxu0 0
        %628 = vmatpush.bf16.msra.mxu0 0
        %629 = vmatpush.bf16.msra.mxu0 %v620
        %630 = vmatmul.bf16.gmra.mxu0 %v617
        %v631 = vpop.f32.mrf.mxu0
        %v632 = vadd.f32 0.0, %v631
        %v633 = vpop.f32.mrf.mxu0
        %634 = vdwg.mxu0
        %v635 = vld [vmem:[#allocation5] sm:$0xff]
        %v636 = vld [vmem:[#allocation5 + $0x8] sm:$0xff]
        %638 = vset.pattern.permute.xlu0 0
        %639 = vperm.xlu0 %638, %v556
        %v640 = vpop.permute.xlu0 %639
        %643 = vset.pattern.permute.xlu0 0
        %644 = vperm.xlu0 %643, %v558
        %v645 = vpop.permute.xlu0 %644
        %v647 = vmul.f32 %v640, %v635
        %v648 = vmul.f32 %v645, %v636
        %v649 = vadd.f32 %v647, %v613
        %v650 = vadd.f32 %v648, %v632
        %651 = vst.msk [vmem:[#allocation5] sm:$0xff] %vm495, %v649
        %652 = vst.msk [vmem:[#allocation5 + $0x8] sm:$0xff] %vm495, %v650
        %653 = vst.msk [vmem:[#allocation3] sm:$0xff] %vm589, %v551
        %654 = vst.msk [vmem:[#allocation3 + $0x8] sm:$0xff] %vm589, %v552
      $region44: #{gpt_forward.10} parent=31 // pred_fallthru
        _
      // Predicated region
      $region45: #{gpt_forward.10} parent=31 // pred_check
        %p655 = pneg %p307
      $region46: #{gpt_forward.10} parent=31 // pred_check_branch
        %657 = sbr.rel (%p655) target = $region48
      $region47: #{gpt_forward.10} parent=31 // pred_region
        %v658 = vld [vmem:[#allocation4] sm:$0xff]
        %v659 = vld [vmem:[#allocation4 + $0x8] sm:$0xff]
        %v660 = vrcp.pop %v658
        %v661 = vrcp.pop %v659
        %v662 = vld [vmem:[#allocation5] sm:$0xff]
        %v663 = vld [vmem:[#allocation5 + $0x8] sm:$0xff]
        %665 = vset.pattern.permute.xlu0 0
        %666 = vperm.xlu0 %665, %v660
        %v667 = vpop.permute.xlu0 %666
        %670 = vset.pattern.permute.xlu0 0
        %671 = vperm.xlu0 %670, %v661
        %v672 = vpop.permute.xlu0 %671
        %v674 = vmul.f32 %v662, %v667
        %v675 = vmul.f32 %v663, %v672
        %v676 = vpack.c.bf16 %v674, %v674
        %v677 = vpack.c.bf16 %v675, %v675
        %vm678 = vcmask 60416
        %679 = vst.msk [vmem:[%s304] sm:$0xf] %vm678, %v676
        %680 = vst.msk [vmem:[%s304 + $0x4] sm:$0xf] %vm678, %v677
      $region48: #{gpt_forward.10} parent=31 // pred_fallthru
        _
      %s681 = smul.u32 2, %s19
      %p682 = scmp.lt.s32.totalorder %s681, 7
      %s683 = scalar_select %p682, %s681, 7
      %p684 = scmp.lt.s32.totalorder %s20, 0
      %s685 = scalar_select %p684, %s20, 0
      %s686 = sadd.s32 %s685, %s683
      %s687 = smul.addr %s686, 4
      %s688 = scalar_lea.vmem %s3, %s687
      // Predicated region
      $region49: #{gpt_forward.10} parent=31 // pred_check
        %p689 = pneg %p145
      $region50: #{gpt_forward.10} parent=31 // pred_check_branch
        %691 = sbr.rel (%p689) target = $region52
      $region51: #{gpt_forward.10} parent=31 // pred_region
        %s692 = smul.u32 2, %s19
      $region52: #{gpt_forward.10} parent=31 // pred_fallthru
        _
    $region32: #{gpt_forward.10} parent=5 // pred_fallthru
      _
    %p693 = scmp.le.s32.totalorder 2, %s9
    // Predicated region
    $region53: #{gpt_forward.10} parent=5 // pred_check
      %p694 = pneg %p693
    $region54: #{gpt_forward.10} parent=5 // pred_check_branch
      %696 = sbr.rel (%p694) target = $region56
    $region55: #{gpt_forward.10} parent=5 // pred_region
      %s697 = ssub.s32 %s9, 2
      // Predicated region
      $region57: #{gpt_forward.10} parent=55 // pred_check
        %p698 = pneg %p151
      $region58: #{gpt_forward.10} parent=55 // pred_check_branch
        %700 = sbr.rel (%p698) target = $region60
      $region59: #{gpt_forward.10} parent=55 // pred_region
        %s701 = smul.u32 2, %s22
        %p702 = scmp.lt.s32.totalorder %s701, 7
        %s703 = scalar_select %p702, %s701, 7
        %p704 = scmp.lt.s32.totalorder %s23, 0
        %s705 = scalar_select %p704, %s23, 0
        %s706 = sadd.s32 %s705, %s703
        %s707 = smul.addr %s706, 4
        %s708 = scalar_lea.vmem %s3, %s707
      $region60: #{gpt_forward.10} parent=55 // pred_fallthru
        _
    $region56: #{gpt_forward.10} parent=5 // pred_fallthru
      _
  $region6: #{gpt_forward.10} parent=0 // loop_footer
    %s13 = sadd.s32 1, %s9
  $region7: #{gpt_forward.10} parent=0 // loop_footer_branch
    %8 = sbr.rel target = $region3
  $region8: #{gpt_forward.10} parent=0 // loop_exit
    _

// kernel: gpt_forward.12
$region0: #{gpt_forward.12}
  #allocation0 [shape = 'u32[]', space=smem, size = 0x4, offset = 0x4, fixed_abs, tag = 'smem constant byte address 0x4 - core index']
  #allocation1 [shape = 'u32[72,128]{1,0:T(1,128)}', space=vmem, size = 0x9000, scoped, tag = 'internal scratch']
  #allocation2 [shape = 'bf16[16,32]{1,0:T(8,128)(2,1)}', space=vmem, size = 0x1000, scoped, tag = 'scratch operand']
  %s0 = inlined_call_operand.vmem [shape: f32[16,32], index: 0, kind: input, shape index: {}]
  %s1 = inlined_call_operand.vmem [shape: f32[1,32], index: 1, kind: input, shape index: {}]
  %s2 = inlined_call_operand.vmem [shape: f32[1,32], index: 2, kind: input, shape index: {}]
  %s3 = inlined_call_operand.vmem [shape: bf16[32,128], index: 3, kind: input, shape index: {}]
  %s4 = inlined_call_operand.vmem [shape: f32[1,128], index: 4, kind: input, shape index: {}]
  %s5 = inlined_call_operand.vmem [shape: bf16[128,32], index: 5, kind: input, shape index: {}]
  %s6 = inlined_call_operand.vmem [shape: f32[1,32], index: 6, kind: input, shape index: {}]
  %s7 = inlined_call_operand.vmem [shape: f32[16,32], index: 7, kind: output, shape index: {}]
  %s8 = sld [smem:[#allocation0]]
  $region42: #{gpt_forward.12} parent=0
    _
  %s10 = ssub.s32 1, %s8
  %s11 = scalar_select 0, %s10, %s8
  // Predicated region
  $region2: #{gpt_forward.12} parent=0 // pred_check
    _
  $region3: #{gpt_forward.12} parent=0 // pred_check_branch
    %13 = sbr.rel (0) target = $region5
  $region4: #{gpt_forward.12} parent=0 // pred_region
    _
  $region5: #{gpt_forward.12} parent=0 // pred_fallthru
    _
  // Predicated region
  $region6: #{gpt_forward.12} parent=0 // pred_check
    _
  $region7: #{gpt_forward.12} parent=0 // pred_check_branch
    %15 = sbr.rel (0) target = $region9
  $region8: #{gpt_forward.12} parent=0 // pred_region
    _
  $region9: #{gpt_forward.12} parent=0 // pred_fallthru
    _
  // Predicated region
  $region10: #{gpt_forward.12} parent=0 // pred_check
    _
  $region11: #{gpt_forward.12} parent=0 // pred_check_branch
    %17 = sbr.rel (0) target = $region13
  $region12: #{gpt_forward.12} parent=0 // pred_region
    _
  $region13: #{gpt_forward.12} parent=0 // pred_fallthru
    _
  // Predicated region
  $region14: #{gpt_forward.12} parent=0 // pred_check
    _
  $region15: #{gpt_forward.12} parent=0 // pred_check_branch
    %19 = sbr.rel (0) target = $region17
  $region16: #{gpt_forward.12} parent=0 // pred_region
    _
  $region17: #{gpt_forward.12} parent=0 // pred_fallthru
    _
  // Predicated region
  $region18: #{gpt_forward.12} parent=0 // pred_check
    _
  $region19: #{gpt_forward.12} parent=0 // pred_check_branch
    %21 = sbr.rel (0) target = $region21
  $region20: #{gpt_forward.12} parent=0 // pred_region
    _
  $region21: #{gpt_forward.12} parent=0 // pred_fallthru
    _
  // Predicated region
  $region22: #{gpt_forward.12} parent=0 // pred_check
    _
  $region23: #{gpt_forward.12} parent=0 // pred_check_branch
    %23 = sbr.rel (0) target = $region25
  $region24: #{gpt_forward.12} parent=0 // pred_region
    _
  $region25: #{gpt_forward.12} parent=0 // pred_fallthru
    _
  // Predicated region
  $region26: #{gpt_forward.12} parent=0 // pred_check
    _
  $region27: #{gpt_forward.12} parent=0 // pred_check_branch
    %25 = sbr.rel (0) target = $region29
  $region28: #{gpt_forward.12} parent=0 // pred_region
    _
  $region29: #{gpt_forward.12} parent=0 // pred_fallthru
    _
  %p27 = scmp.eq.s32.totalorder 0, 0
  // Predicated region
  $region30: #{gpt_forward.12} parent=0 // pred_check
    %p28 = pneg %p27
  $region31: #{gpt_forward.12} parent=0 // pred_check_branch
    %30 = sbr.rel (%p28) target = $region33
  $region32: #{gpt_forward.12} parent=0 // pred_region
    %v31 = vld [vmem:[%s0] sm:$0xff]
    %v32 = vld [vmem:[%s0 + $0x8] sm:$0xff]
    %v33 = vld [vmem:[%s1] sm:$0x1]
    %v34 = vld [vmem:[%s2] sm:$0x1]
    %vm35 = vcmask 261120
    %v36 = vsel %vm35, %v31, 0.0
    %37 = vadd.xlane.f32.xlu0 %v36
    %v38 = vpop.xlane.xlu0 %37
    %v39 = vsel %vm35, %v32, 0.0
    %40 = vadd.xlane.f32.xlu0 %v39
    %v41 = vpop.xlane.xlu0 %40
    %v42 = vrcp.pop 32.0
    %v43 = vmul.f32 32.0, %v42
    %v44 = vsub.f32 1.0, %v43
    %v45 = vmul.f32 %v42, %v44
    %v46 = vadd.f32 %v42, %v45
    %vm47 = vweird.f32 %v42
    %v48 = vsel %vm47, %v42, %v46
    %v49 = vmul.f32 %v38, %v48
    %v50 = vmul.f32 %v41, %v48
    %v51 = vsub.f32 %v31, %v49
    %v52 = vsub.f32 %v32, %v50
    %v53 = vmul.f32 %v51, %v51
    %v54 = vmul.f32 %v52, %v52
    %v55 = vsel %vm35, %v53, 0.0
    %56 = vadd.xlane.f32.xlu0 %v55
    %v57 = vpop.xlane.xlu0 %56
    %v58 = vsel %vm35, %v54, 0.0
    %59 = vadd.xlane.f32.xlu0 %v58
    %v60 = vpop.xlane.xlu0 %59
    %v61 = vmul.f32 %v57, %v48
    %v62 = vmul.f32 %v60, %v48
    %v63 = vadd.f32 %v61, 1e-05
    %v64 = vadd.f32 %v62, 1e-05
    %v65 = vrsqrt.pop %v63
    %v66 = vmul.f32 %v65, %v63
    %v67 = vmul.f32 %v66, %v65
    %v68 = vmul.f32 0.5, %v67
    %v69 = vsub.f32 1.5, %v68
    %v70 = vmul.f32 %v65, %v69
    %vm71 = vweird.f32 %v63
    %vm72 = vweird.f32 %v65
    %vm73 = vmor %vm71, %vm72
    %v74 = vsel %vm73, %v65, %v70
    %v75 = vrsqrt.pop %v64
    %v76 = vmul.f32 %v75, %v64
    %v77 = vmul.f32 %v76, %v75
    %v78 = vmul.f32 0.5, %v77
    %v79 = vsub.f32 1.5, %v78
    %v80 = vmul.f32 %v75, %v79
    %vm81 = vweird.f32 %v64
    %vm82 = vweird.f32 %v75
    %vm83 = vmor %vm81, %vm82
    %v84 = vsel %vm83, %v75, %v80
    %v85 = vmul.f32 %v51, %v74
    %v86 = vmul.f32 %v52, %v84
    %v88 = vperm.slane %v33, 0
    %v90 = vmul.f32 %v85, %v88
    %v91 = vmul.f32 %v86, %v88
    %v93 = vperm.slane %v34, 0
    %v95 = vadd.f32 %v90, %v93
    %v96 = vadd.f32 %v91, %v93
    %v97 = vpack.c.bf16 %v95, %v95
    %v98 = vpack.c.bf16 %v96, %v96
    %vm99 = vcmask 257024
    %100 = vst.msk [vmem:[#allocation2] sm:$0xf] %vm99, %v97
    %101 = vst.msk [vmem:[#allocation2 + $0x4] sm:$0xf] %vm99, %v98
    %v102 = vld [vmem:[%s0] sm:$0xff]
    %v103 = vld [vmem:[%s0 + $0x8] sm:$0xff]
    %v104 = vld [vmem:[%s6] sm:$0x1]
    %v106 = vperm.slane %v104, 0
    %v108 = vadd.f32 %v102, %v106
    %v109 = vadd.f32 %v103, %v106
    %110 = vst.msk [vmem:[%s7] sm:$0xff] %vm35, %v108
    %111 = vst.msk [vmem:[%s7 + $0x8] sm:$0xff] %vm35, %v109
  $region33: #{gpt_forward.12} parent=0 // pred_fallthru
    _
  %v112 = vld [vmem:[#allocation2] sm:$0xf]
  %v113 = vld [vmem:[#allocation2 + $0x4] sm:$0xf]
  %v114 = vld [vmem:[%s3] sm:$0xf]
  %v115 = vld [vmem:[%s3 + $0x4] sm:$0xf]
  %v116 = vld [vmem:[%s3 + $0x8] sm:$0xf]
  %v117 = vld [vmem:[%s3 + $0xc] sm:$0xf]
  %v118 = vld [vmem:[%s4] sm:$0x1]
  %v120 = vperm.slane %v118, 0
  %v124 = vunpack.c.l.b16 %v112
  %v125 = vunpack.c.l.b16 %v113
  %v126 = vpack.c.b16 %v125, %v124
  %v131 = vunpack.c.l.b16 %v114
  %v132 = vunpack.c.l.b16 %v115
  %v133 = vunpack.c.l.b16 %v116
  %v134 = vunpack.c.l.b16 %v117
  %v135 = vpack.c.b16 %v132, %v131
  %v136 = vpack.c.b16 %v134, %v133
  %vm139 = vcmask 261120
  %v141 = vsel %vm139, %v126, 0
  %143 = vmatpush.bf16.msra.mxu0 0
  %144 = vmatpush.bf16.msra.mxu0 0
  %145 = vmatpush.bf16.msra.mxu0 0
  %146 = vmatpush.bf16.msra.mxu0 0
  %147 = vmatpush.bf16.msra.mxu0 0
  %148 = vmatpush.bf16.msra.mxu0 0
  %149 = vmatpush.bf16.msra.mxu0 %v136
  %150 = vmatpush.bf16.msra.mxu0 %v135
  %151 = vmatmul.bf16.gmra.mxu0 %v141
  %v152 = vpop.f32.mrf.mxu0
  %v153 = vadd.f32 %v120, %v152
  %v154 = vpop.f32.mrf.mxu0
  %v155 = vadd.f32 %v120, %v154
  %156 = vdwg.mxu0
  %v157 = vmul.f32 %v153, 0.5
  %v158 = vmul.f32 %v155, 0.5
  %v159 = vmul.f32 %v153, 0.044715
  %v160 = vmul.f32 %v155, 0.044715
  %v161 = vmul.f32 %v159, %v153
  %v162 = vmul.f32 %v160, %v155
  %v163 = vmul.f32 %v161, %v153
  %v164 = vmul.f32 %v162, %v155
  %v165 = vadd.f32 %v153, %v163
  %v166 = vadd.f32 %v155, %v164
  %v167 = vmul.f32 %v165, 0.7978846
  %v168 = vmul.f32 %v166, 0.7978846
  %v169 = vtanh.pop %v167
  %v170 = vtanh.pop %v168
  %v171 = vadd.f32 %v169, 1.0
  %v172 = vadd.f32 %v170, 1.0
  %v173 = vmul.f32 %v157, %v171
  %v174 = vmul.f32 %v158, %v172
  %v175 = vld [vmem:[%s7] sm:$0xff]
  %v176 = vld [vmem:[%s7 + $0x8] sm:$0xff]
  %v177 = vpack.c.bf16 %v174, %v173
  %v178 = vld [vmem:[%s5] sm:$0xf]
  %v179 = vld [vmem:[%s5 + $0x4] sm:$0xf]
  %v180 = vld [vmem:[%s5 + $0x8] sm:$0xf]
  %v181 = vld [vmem:[%s5 + $0xc] sm:$0xf]
  %v182 = vld [vmem:[%s5 + $0x10] sm:$0xf]
  %v183 = vld [vmem:[%s5 + $0x14] sm:$0xf]
  %v184 = vld [vmem:[%s5 + $0x18] sm:$0xf]
  %v185 = vld [vmem:[%s5 + $0x1c] sm:$0xf]
  %v186 = vld [vmem:[%s5 + $0x20] sm:$0xf]
  %v187 = vld [vmem:[%s5 + $0x24] sm:$0xf]
  %v188 = vld [vmem:[%s5 + $0x28] sm:$0xf]
  %v189 = vld [vmem:[%s5 + $0x2c] sm:$0xf]
  %v190 = vld [vmem:[%s5 + $0x30] sm:$0xf]
  %v191 = vld [vmem:[%s5 + $0x34] sm:$0xf]
  %v192 = vld [vmem:[%s5 + $0x38] sm:$0xf]
  %v193 = vld [vmem:[%s5 + $0x3c] sm:$0xf]
  %v210 = vunpack.c.l.b16 %v178
  %v211 = vunpack.c.l.b16 %v179
  %v212 = vunpack.c.l.b16 %v180
  %v213 = vunpack.c.l.b16 %v181
  %v214 = vunpack.c.l.b16 %v182
  %v215 = vunpack.c.l.b16 %v183
  %v216 = vunpack.c.l.b16 %v184
  %v217 = vunpack.c.l.b16 %v185
  %v218 = vunpack.c.l.b16 %v186
  %v219 = vunpack.c.l.b16 %v187
  %v220 = vunpack.c.l.b16 %v188
  %v221 = vunpack.c.l.b16 %v189
  %v222 = vunpack.c.l.b16 %v190
  %v223 = vunpack.c.l.b16 %v191
  %v224 = vunpack.c.l.b16 %v192
  %v225 = vunpack.c.l.b16 %v193
  %v226 = vpack.c.b16 %v211, %v210
  %v227 = vpack.c.b16 %v213, %v212
  %v228 = vpack.c.b16 %v215, %v214
  %v229 = vpack.c.b16 %v217, %v216
  %v230 = vpack.c.b16 %v219, %v218
  %v231 = vpack.c.b16 %v221, %v220
  %v232 = vpack.c.b16 %v223, %v222
  %v233 = vpack.c.b16 %v225, %v224
  %242 = vmatpush.bf16.msra.mxu0 %v233
  %243 = vmatpush.bf16.msra.mxu0 %v232
  %244 = vmatpush.bf16.msra.mxu0 %v231
  %245 = vmatpush.bf16.msra.mxu0 %v230
  %246 = vmatpush.bf16.msra.mxu0 %v229
  %247 = vmatpush.bf16.msra.mxu0 %v228
  %248 = vmatpush.bf16.msra.mxu0 %v227
  %249 = vmatpush.bf16.msra.mxu0 %v226
  %250 = vmatmul.bf16.gmra.mxu0 %v177
  %v251 = vpop.f32.mrf.mxu0
  %v252 = vadd.f32 0.0, %v251
  %v253 = vpop.f32.mrf.mxu0
  %v254 = vadd.f32 0.0, %v253
  %255 = vdwg.mxu0
  %v256 = vadd.f32 %v175, %v252
  %v257 = vadd.f32 %v176, %v254
  %258 = vst.msk [vmem:[%s7] sm:$0xff] %vm139, %v256
  %259 = vst.msk [vmem:[%s7 + $0x8] sm:$0xff] %vm139, %v257
  // Predicated region
  $region34: #{gpt_forward.12} parent=0 // pred_check
    _
  $region35: #{gpt_forward.12} parent=0 // pred_check_branch
    %261 = sbr.rel (0) target = $region37
  $region36: #{gpt_forward.12} parent=0 // pred_region
    _
  $region37: #{gpt_forward.12} parent=0 // pred_fallthru
    _
  // Predicated region
  $region38: #{gpt_forward.12} parent=0 // pred_check
    _
  $region39: #{gpt_forward.12} parent=0 // pred_check_branch
    %263 = sbr.rel (0) target = $region41
  $region40: #{gpt_forward.12} parent=0 // pred_region
    _
  $region41: #{gpt_forward.12} parent=0 // pred_fallthru
    _

// kernel: gpt_forward.17
$region0: #{gpt_forward.17}
  #allocation0 [shape = 'u32[]', space=smem, size = 0x4, offset = 0x4, fixed_abs, tag = 'smem constant byte address 0x4 - core index']
  #allocation1 [shape = 'u32[72,128]{1,0:T(1,128)}', space=vmem, size = 0x9000, scoped, tag = 'internal scratch']
  #allocation2 [shape = 'bf16[16,32]{1,0:T(8,128)(2,1)}', space=vmem, size = 0x1000, scoped, tag = 'scratch operand']
  %s0 = inlined_call_operand.vmem [shape: f32[16,32], index: 0, kind: input, shape index: {}]
  %s1 = inlined_call_operand.vmem [shape: f32[1,32], index: 1, kind: input, shape index: {}]
  %s2 = inlined_call_operand.vmem [shape: f32[1,32], index: 2, kind: input, shape index: {}]
  %s3 = inlined_call_operand.vmem [shape: bf16[32,1024], index: 3, kind: input, shape index: {}]
  %s4 = inlined_call_operand.vmem [shape: f32[16,1024], index: 4, kind: output, shape index: {}]
  %s5 = sld [smem:[#allocation0]]
  $region30: #{gpt_forward.17} parent=0
    _
  %s7 = ssub.s32 1, %s5
  %s8 = scalar_select 0, %s7, %s5
  // Predicated region
  $region2: #{gpt_forward.17} parent=0 // pred_check
    _
  $region3: #{gpt_forward.17} parent=0 // pred_check_branch
    %10 = sbr.rel (0) target = $region5
  $region4: #{gpt_forward.17} parent=0 // pred_region
    _
  $region5: #{gpt_forward.17} parent=0 // pred_fallthru
    _
  // Predicated region
  $region6: #{gpt_forward.17} parent=0 // pred_check
    _
  $region7: #{gpt_forward.17} parent=0 // pred_check_branch
    %12 = sbr.rel (0) target = $region9
  $region8: #{gpt_forward.17} parent=0 // pred_region
    _
  $region9: #{gpt_forward.17} parent=0 // pred_fallthru
    _
  // Predicated region
  $region10: #{gpt_forward.17} parent=0 // pred_check
    _
  $region11: #{gpt_forward.17} parent=0 // pred_check_branch
    %14 = sbr.rel (0) target = $region13
  $region12: #{gpt_forward.17} parent=0 // pred_region
    _
  $region13: #{gpt_forward.17} parent=0 // pred_fallthru
    _
  // Predicated region
  $region14: #{gpt_forward.17} parent=0 // pred_check
    _
  $region15: #{gpt_forward.17} parent=0 // pred_check_branch
    %16 = sbr.rel (0) target = $region17
  $region16: #{gpt_forward.17} parent=0 // pred_region
    _
  $region17: #{gpt_forward.17} parent=0 // pred_fallthru
    _
  %p18 = scmp.eq.s32.totalorder 0, 0
  // Predicated region
  $region18: #{gpt_forward.17} parent=0 // pred_check
    %p19 = pneg %p18
  $region19: #{gpt_forward.17} parent=0 // pred_check_branch
    %21 = sbr.rel (%p19) target = $region21
  $region20: #{gpt_forward.17} parent=0 // pred_region
    %v22 = vld [vmem:[%s0] sm:$0xff]
    %v23 = vld [vmem:[%s0 + $0x8] sm:$0xff]
    %v24 = vld [vmem:[%s1] sm:$0x1]
    %v25 = vld [vmem:[%s2] sm:$0x1]
    %vm26 = vcmask 261120
    %v27 = vsel %vm26, %v22, 0.0
    %28 = vadd.xlane.f32.xlu0 %v27
    %v29 = vpop.xlane.xlu0 %28
    %v30 = vsel %vm26, %v23, 0.0
    %31 = vadd.xlane.f32.xlu0 %v30
    %v32 = vpop.xlane.xlu0 %31
    %v33 = vrcp.pop 32.0
    %v34 = vmul.f32 32.0, %v33
    %v35 = vsub.f32 1.0, %v34
    %v36 = vmul.f32 %v33, %v35
    %v37 = vadd.f32 %v33, %v36
    %vm38 = vweird.f32 %v33
    %v39 = vsel %vm38, %v33, %v37
    %v40 = vmul.f32 %v29, %v39
    %v41 = vmul.f32 %v32, %v39
    %v42 = vsub.f32 %v22, %v40
    %v43 = vsub.f32 %v23, %v41
    %v44 = vmul.f32 %v42, %v42
    %v45 = vmul.f32 %v43, %v43
    %v46 = vsel %vm26, %v44, 0.0
    %47 = vadd.xlane.f32.xlu0 %v46
    %v48 = vpop.xlane.xlu0 %47
    %v49 = vsel %vm26, %v45, 0.0
    %50 = vadd.xlane.f32.xlu0 %v49
    %v51 = vpop.xlane.xlu0 %50
    %v52 = vmul.f32 %v48, %v39
    %v53 = vmul.f32 %v51, %v39
    %v54 = vadd.f32 %v52, 1e-05
    %v55 = vadd.f32 %v53, 1e-05
    %v56 = vrsqrt.pop %v54
    %v57 = vmul.f32 %v56, %v54
    %v58 = vmul.f32 %v57, %v56
    %v59 = vmul.f32 0.5, %v58
    %v60 = vsub.f32 1.5, %v59
    %v61 = vmul.f32 %v56, %v60
    %vm62 = vweird.f32 %v54
    %vm63 = vweird.f32 %v56
    %vm64 = vmor %vm62, %vm63
    %v65 = vsel %vm64, %v56, %v61
    %v66 = vrsqrt.pop %v55
    %v67 = vmul.f32 %v66, %v55
    %v68 = vmul.f32 %v67, %v66
    %v69 = vmul.f32 0.5, %v68
    %v70 = vsub.f32 1.5, %v69
    %v71 = vmul.f32 %v66, %v70
    %vm72 = vweird.f32 %v55
    %vm73 = vweird.f32 %v66
    %vm74 = vmor %vm72, %vm73
    %v75 = vsel %vm74, %v66, %v71
    %v76 = vmul.f32 %v42, %v65
    %v77 = vmul.f32 %v43, %v75
    %v79 = vperm.slane %v24, 0
    %v81 = vmul.f32 %v76, %v79
    %v82 = vmul.f32 %v77, %v79
    %v84 = vperm.slane %v25, 0
    %v86 = vadd.f32 %v81, %v84
    %v87 = vadd.f32 %v82, %v84
    %v88 = vpack.c.bf16 %v86, %v86
    %v89 = vpack.c.bf16 %v87, %v87
    %vm90 = vcmask 257024
    %91 = vst.msk [vmem:[#allocation2] sm:$0xf] %vm90, %v88
    %92 = vst.msk [vmem:[#allocation2 + $0x4] sm:$0xf] %vm90, %v89
  $region21: #{gpt_forward.17} parent=0 // pred_fallthru
    _
  %v93 = vld [vmem:[#allocation2] sm:$0xf]
  %v94 = vld [vmem:[#allocation2 + $0x4] sm:$0xf]
  %v95 = vld [vmem:[%s3] sm:$0xff]
  %v96 = vld [vmem:[%s3 + $0x8] sm:$0xff]
  %v97 = vld [vmem:[%s3 + $0x10] sm:$0xff]
  %v98 = vld [vmem:[%s3 + $0x18] sm:$0xff]
  %v99 = vld [vmem:[%s3 + $0x20] sm:$0xff]
  %v100 = vld [vmem:[%s3 + $0x28] sm:$0xff]
  %v101 = vld [vmem:[%s3 + $0x30] sm:$0xff]
  %v102 = vld [vmem:[%s3 + $0x38] sm:$0xff]
  %v103 = vld [vmem:[%s3 + $0x40] sm:$0xff]
  %v104 = vld [vmem:[%s3 + $0x48] sm:$0xff]
  %v105 = vld [vmem:[%s3 + $0x50] sm:$0xff]
  %v106 = vld [vmem:[%s3 + $0x58] sm:$0xff]
  %v107 = vld [vmem:[%s3 + $0x60] sm:$0xff]
  %v108 = vld [vmem:[%s3 + $0x68] sm:$0xff]
  %v109 = vld [vmem:[%s3 + $0x70] sm:$0xff]
  %v110 = vld [vmem:[%s3 + $0x78] sm:$0xff]
  %v113 = vunpack.c.l.b16 %v93
  %v114 = vunpack.c.l.b16 %v94
  %v115 = vpack.c.b16 %v114, %v113
  %v132 = vunpack.c.l.b16 %v95
  %v133 = vunpack.c.h.b16 %v95
  %v134 = vunpack.c.l.b16 %v96
  %v135 = vunpack.c.h.b16 %v96
  %v136 = vunpack.c.l.b16 %v97
  %v137 = vunpack.c.h.b16 %v97
  %v138 = vunpack.c.l.b16 %v98
  %v139 = vunpack.c.h.b16 %v98
  %v140 = vunpack.c.l.b16 %v99
  %v141 = vunpack.c.h.b16 %v99
  %v142 = vunpack.c.l.b16 %v100
  %v143 = vunpack.c.h.b16 %v100
  %v144 = vunpack.c.l.b16 %v101
  %v145 = vunpack.c.h.b16 %v101
  %v146 = vunpack.c.l.b16 %v102
  %v147 = vunpack.c.h.b16 %v102
  %v148 = vunpack.c.l.b16 %v103
  %v149 = vunpack.c.h.b16 %v103
  %v150 = vunpack.c.l.b16 %v104
  %v151 = vunpack.c.h.b16 %v104
  %v152 = vunpack.c.l.b16 %v105
  %v153 = vunpack.c.h.b16 %v105
  %v154 = vunpack.c.l.b16 %v106
  %v155 = vunpack.c.h.b16 %v106
  %v156 = vunpack.c.l.b16 %v107
  %v157 = vunpack.c.h.b16 %v107
  %v158 = vunpack.c.l.b16 %v108
  %v159 = vunpack.c.h.b16 %v108
  %v160 = vunpack.c.l.b16 %v109
  %v161 = vunpack.c.h.b16 %v109
  %v162 = vunpack.c.l.b16 %v110
  %v163 = vunpack.c.h.b16 %v110
  %v164 = vpack.c.b16 %v140, %v132
  %v165 = vpack.c.b16 %v141, %v133
  %v166 = vpack.c.b16 %v142, %v134
  %v167 = vpack.c.b16 %v143, %v135
  %v168 = vpack.c.b16 %v144, %v136
  %v169 = vpack.c.b16 %v145, %v137
  %v170 = vpack.c.b16 %v146, %v138
  %v171 = vpack.c.b16 %v147, %v139
  %v172 = vpack.c.b16 %v156, %v148
  %v173 = vpack.c.b16 %v157, %v149
  %v174 = vpack.c.b16 %v158, %v150
  %v175 = vpack.c.b16 %v159, %v151
  %v176 = vpack.c.b16 %v160, %v152
  %v177 = vpack.c.b16 %v161, %v153
  %v178 = vpack.c.b16 %v162, %v154
  %v179 = vpack.c.b16 %v163, %v155
  %vm196 = vcmask 261120
  %v198 = vsel %vm196, %v115, 0
  %200 = vmatpush.bf16.msra.mxu0 0
  %201 = vmatpush.bf16.msra.mxu0 0
  %202 = vmatpush.bf16.msra.mxu0 0
  %203 = vmatpush.bf16.msra.mxu0 0
  %204 = vmatpush.bf16.msra.mxu0 0
  %205 = vmatpush.bf16.msra.mxu0 0
  %206 = vmatpush.bf16.msra.mxu0 %v172
  %207 = vmatpush.bf16.msra.mxu0 %v164
  %208 = vmatmul.bf16.gmra.mxu0 %v198
  %v209 = vpop.f32.mrf.mxu0
  %v210 = vadd.f32 0.0, %v209
  %v211 = vpop.f32.mrf.mxu0
  %v212 = vadd.f32 0.0, %v211
  %213 = vdwg.mxu0
  %214 = vmatpush.bf16.msra.mxu0 0
  %215 = vmatpush.bf16.msra.mxu0 0
  %216 = vmatpush.bf16.msra.mxu0 0
  %217 = vmatpush.bf16.msra.mxu0 0
  %218 = vmatpush.bf16.msra.mxu0 0
  %219 = vmatpush.bf16.msra.mxu0 0
  %220 = vmatpush.bf16.msra.mxu0 %v173
  %221 = vmatpush.bf16.msra.mxu0 %v165
  %222 = vmatmul.bf16.gmra.mxu0 %v198
  %v223 = vpop.f32.mrf.mxu0
  %v224 = vadd.f32 0.0, %v223
  %v225 = vpop.f32.mrf.mxu0
  %v226 = vadd.f32 0.0, %v225
  %227 = vdwg.mxu0
  %228 = vmatpush.bf16.msra.mxu0 0
  %229 = vmatpush.bf16.msra.mxu0 0
  %230 = vmatpush.bf16.msra.mxu0 0
  %231 = vmatpush.bf16.msra.mxu0 0
  %232 = vmatpush.bf16.msra.mxu0 0
  %233 = vmatpush.bf16.msra.mxu0 0
  %234 = vmatpush.bf16.msra.mxu0 %v174
  %235 = vmatpush.bf16.msra.mxu0 %v166
  %236 = vmatmul.bf16.gmra.mxu0 %v198
  %v237 = vpop.f32.mrf.mxu0
  %v238 = vadd.f32 0.0, %v237
  %v239 = vpop.f32.mrf.mxu0
  %v240 = vadd.f32 0.0, %v239
  %241 = vdwg.mxu0
  %242 = vmatpush.bf16.msra.mxu0 0
  %243 = vmatpush.bf16.msra.mxu0 0
  %244 = vmatpush.bf16.msra.mxu0 0
  %245 = vmatpush.bf16.msra.mxu0 0
  %246 = vmatpush.bf16.msra.mxu0 0
  %247 = vmatpush.bf16.msra.mxu0 0
  %248 = vmatpush.bf16.msra.mxu0 %v175
  %249 = vmatpush.bf16.msra.mxu0 %v167
  %250 = vmatmul.bf16.gmra.mxu0 %v198
  %v251 = vpop.f32.mrf.mxu0
  %v252 = vadd.f32 0.0, %v251
  %v253 = vpop.f32.mrf.mxu0
  %v254 = vadd.f32 0.0, %v253
  %255 = vdwg.mxu0
  %256 = vmatpush.bf16.msra.mxu0 0
  %257 = vmatpush.bf16.msra.mxu0 0
  %258 = vmatpush.bf16.msra.mxu0 0
  %259 = vmatpush.bf16.msra.mxu0 0
  %260 = vmatpush.bf16.msra.mxu0 0
  %261 = vmatpush.bf16.msra.mxu0 0
  %262 = vmatpush.bf16.msra.mxu0 %v176
  %263 = vmatpush.bf16.msra.mxu0 %v168
  %264 = vmatmul.bf16.gmra.mxu0 %v198
  %v265 = vpop.f32.mrf.mxu0
  %v266 = vadd.f32 0.0, %v265
  %v267 = vpop.f32.mrf.mxu0
  %v268 = vadd.f32 0.0, %v267
  %269 = vdwg.mxu0
  %270 = vmatpush.bf16.msra.mxu0 0
  %271 = vmatpush.bf16.msra.mxu0 0
  %272 = vmatpush.bf16.msra.mxu0 0
  %273 = vmatpush.bf16.msra.mxu0 0
  %274 = vmatpush.bf16.msra.mxu0 0
  %275 = vmatpush.bf16.msra.mxu0 0
  %276 = vmatpush.bf16.msra.mxu0 %v177
  %277 = vmatpush.bf16.msra.mxu0 %v169
  %278 = vmatmul.bf16.gmra.mxu0 %v198
  %v279 = vpop.f32.mrf.mxu0
  %v280 = vadd.f32 0.0, %v279
  %v281 = vpop.f32.mrf.mxu0
  %v282 = vadd.f32 0.0, %v281
  %283 = vdwg.mxu0
  %284 = vmatpush.bf16.msra.mxu0 0
  %285 = vmatpush.bf16.msra.mxu0 0
  %286 = vmatpush.bf16.msra.mxu0 0
  %287 = vmatpush.bf16.msra.mxu0 0
  %288 = vmatpush.bf16.msra.mxu0 0
  %289 = vmatpush.bf16.msra.mxu0 0
  %290 = vmatpush.bf16.msra.mxu0 %v178
  %291 = vmatpush.bf16.msra.mxu0 %v170
  %292 = vmatmul.bf16.gmra.mxu0 %v198
  %v293 = vpop.f32.mrf.mxu0
  %v294 = vadd.f32 0.0, %v293
  %v295 = vpop.f32.mrf.mxu0
  %v296 = vadd.f32 0.0, %v295
  %297 = vdwg.mxu0
  %298 = vmatpush.bf16.msra.mxu0 0
  %299 = vmatpush.bf16.msra.mxu0 0
  %300 = vmatpush.bf16.msra.mxu0 0
  %301 = vmatpush.bf16.msra.mxu0 0
  %302 = vmatpush.bf16.msra.mxu0 0
  %303 = vmatpush.bf16.msra.mxu0 0
  %304 = vmatpush.bf16.msra.mxu0 %v179
  %305 = vmatpush.bf16.msra.mxu0 %v171
  %306 = vmatmul.bf16.gmra.mxu0 %v198
  %v307 = vpop.f32.mrf.mxu0
  %v308 = vadd.f32 0.0, %v307
  %v309 = vpop.f32.mrf.mxu0
  %v310 = vadd.f32 0.0, %v309
  %311 = vdwg.mxu0
  %312 = vst [vmem:[%s4] sm:$0xff] %v210
  %313 = vst [vmem:[%s4 + $0x8] sm:$0xff] %v224
  %314 = vst [vmem:[%s4 + $0x10] sm:$0xff] %v238
  %315 = vst [vmem:[%s4 + $0x18] sm:$0xff] %v252
  %316 = vst [vmem:[%s4 + $0x20] sm:$0xff] %v266
  %317 = vst [vmem:[%s4 + $0x28] sm:$0xff] %v280
  %318 = vst [vmem:[%s4 + $0x30] sm:$0xff] %v294
  %319 = vst [vmem:[%s4 + $0x38] sm:$0xff] %v308
  %320 = vst [vmem:[%s4 + $0x40] sm:$0xff] %v212
  %321 = vst [vmem:[%s4 + $0x48] sm:$0xff] %v226
  %322 = vst [vmem:[%s4 + $0x50] sm:$0xff] %v240
  %323 = vst [vmem:[%s4 + $0x58] sm:$0xff] %v254
  %324 = vst [vmem:[%s4 + $0x60] sm:$0xff] %v268
  %325 = vst [vmem:[%s4 + $0x68] sm:$0xff] %v282
  %326 = vst [vmem:[%s4 + $0x70] sm:$0xff] %v296
  %327 = vst [vmem:[%s4 + $0x78] sm:$0xff] %v310
  // Predicated region
  $region22: #{gpt_forward.17} parent=0 // pred_check
    _
  $region23: #{gpt_forward.17} parent=0 // pred_check_branch
    %329 = sbr.rel (0) target = $region25
  $region24: #{gpt_forward.17} parent=0 // pred_region
    _
  $region25: #{gpt_forward.17} parent=0 // pred_fallthru
    _
  // Predicated region
  $region26: #{gpt_forward.17} parent=0 // pred_check
    _
  $region27: #{gpt_forward.17} parent=0 // pred_check_branch
    %331 = sbr.rel (0) target = $region29
  $region28: #{gpt_forward.17} parent=0 // pred_region
    _
  $region29: #{gpt_forward.17} parent=0 // pred_fallthru
    _

</llo_original>
